<compile_context>
chip_gen: v5e
topology: v5e:2x2
jax: 0.10.0
libtpu: 0.0.40
codegen_flags: <defaults>
</compile_context>

<pallas_src>
import functools

import jax
import jax.numpy as jnp
from jax.experimental import pallas as pl
from jax.experimental.pallas import tpu as pltpu

_LANE = 128
_SQRT_2_OVER_PI = 0.7978845608028654


def _round_up(x, m):
    return ((x + m - 1) // m) * m


def _choose_row_tile(m, cap=256):
    """Row tile: multiple of 16 (bf16 packs 2 rows per sublane), large enough
    to amortize the ~0.35us per-step overhead, but aiming for >=4 grid steps
    so the 'parallel' row axis can split across v7x's two TensorCores."""
    t = _round_up(max(1, -(-m // 4)), 16)
    return int(max(16, min(cap, t)))


def _vmem_limit(need_bytes, *, cap=64 * 1024 * 1024, floor=16 * 1024 * 1024):
    """Scoped-VMEM limit derived from the actual operand footprint, capped at
    v7x's 64 MiB physical VMEM (v5e/v6e have 128 MiB, so the cap is safe
    everywhere)."""
    want = int(need_bytes * 3 // 2) + (4 << 20)
    return int(max(floor, min(cap, _round_up(want, 1 << 20))))


def _gelu_tanh(x):
    # TODO(synk): PyTorch nn.GELU() defaults to the exact erf form; the tanh
    # approximation is used in-kernel (max abs diff ~1e-3 pre-normalize).
    return 0.5 * x * (1.0 + jnp.tanh(_SQRT_2_OVER_PI * (x + 0.044715 * x * x * x)))


def _masked_layernorm(x, gamma, beta, eps, true_dim):
    """LayerNorm over the last dim of a lane-padded (tm, width) f32 tile.

    Invariant: padded lanes of `x` are exactly 0 (zero-padded inputs, weight
    columns and biases), so the un-masked sum already equals the true-lane
    sum; only the centered term needs masking for the variance.  gamma/beta
    are zero-padded, so padded output lanes come out exactly 0 again.
    """
    width = x.shape[-1]
    inv_n = 1.0 / float(true_dim)
    mean = jnp.sum(x, axis=-1, keepdims=True) * inv_n
    centered = x - mean
    if true_dim != width:
        mask = (jax.lax.broadcasted_iota(jnp.int32, (1, width), 1)
                < true_dim).astype(jnp.float32)
        centered = centered * mask
    var = jnp.sum(centered * centered, axis=-1, keepdims=True) * inv_n
    return centered * jax.lax.rsqrt(var + eps) * gamma + beta


# ---------------------------------------------------------------------------
# Kernel 1: one full CLIP tower (encoder + projection head + L2 normalize)
# ---------------------------------------------------------------------------
def clip_tower_kernel(x_ref, ew_ref, ev_ref, p1w_ref, p1v_ref, p2w_ref, p2v_ref,
                      o_ref, *, num_layers, true_h, true_dh, true_p,
                      enc_eps, proj_eps, l2_eps):
    # x_ref:  (tm, Hp)    f32 activation row tile (lane-padded, padded lanes 0)
    # ew_ref: (L, Hp, Hp) bf16 encoder weights, pre-transposed to (in, out)
    # ev_ref: (L+2, Hp)   f32 rows [0..L-1]=bias, [L]=LN gamma, [L+1]=LN beta
    # p1w_ref:(Hp, Dhp)   bf16;  p1v_ref: (3, Dhp) f32 = bias / gamma / beta
    # p2w_ref:(Dhp, Pp)   bf16;  p2v_ref: (3, Pp)  f32 = bias / gamma / beta
    # o_ref:  (tm, Pp)    f32 L2-normalized embeddings (lane-dense slab)

    ev = ev_ref[...]
    x = x_ref[...].astype(jnp.float32)

    # ---- CLIPEncoder: [Linear -> ReLU] x L, then LayerNorm -----------------
    for l in range(num_layers):                       # small static layer count
        w = ew_ref[l]                                 # bf16 -> MXU native rate
        y = jnp.dot(x.astype(w.dtype), w, preferred_element_type=jnp.float32)
        x = jnp.maximum(y + ev[l:l + 1, :], 0.0)      # bias + ReLU in f32
    x = _masked_layernorm(x, ev[num_layers:num_layers + 1, :],
                          ev[num_layers + 1:num_layers + 2, :], enc_eps, true_h)

    # ---- ProjectionHead: Linear -> LN -> GELU -> Dropout(id) -> Linear -> LN
    v1 = p1v_ref[...]
    w1 = p1w_ref[...]
    h = jnp.dot(x.astype(w1.dtype), w1,
                preferred_element_type=jnp.float32) + v1[0:1, :]
    h = _masked_layernorm(h, v1[1:2, :], v1[2:3, :], proj_eps, true_dh)
    h = _gelu_tanh(h)
    # TODO(synk): Dropout(p=0.1) is identity at inference; training-mode
    # stochastic dropout (pltpu.prng_*) is not implemented here.
    v2 = p2v_ref[...]
    w2 = p2w_ref[...]
    z = jnp.dot(h.astype(w2.dtype), w2,
                preferred_element_type=jnp.float32) + v2[0:1, :]
    z = _masked_layernorm(z, v2[1:2, :], v2[2:3, :], proj_eps, true_p)

    # ---- F.normalize(dim=-1): z / max(||z||, eps) == z * rsqrt(max(ss, eps^2))
    sumsq = jnp.sum(z * z, axis=-1, keepdims=True)
    inv_norm = jax.lax.rsqrt(jnp.maximum(sumsq, l2_eps * l2_eps))
    o_ref[...] = (z * inv_norm).astype(o_ref.dtype)


def clip_tower(x, tw, dims, *, enc_eps, proj_eps=1e-5, l2_eps=1e-12,
               max_row_tile=256):
    """x: (M, H) f32 rows.  `tw` holds lane-padded kernel-layout params.
    Returns (M, Pp) embeddings; true lanes [:P] hold the L2-normalized output,
    padded lanes are exactly 0 (safe to feed straight into the logits matmul)."""
    M, H = x.shape
    L, Hp, _ = tw['enc_w'].shape
    Dhp = tw['p1_w'].shape[1]
    Pp = tw['p2_w'].shape[1]

    tm = _choose_row_tile(M, max_row_tile)
    M_pad = _round_up(M, tm)
    if M_pad != M or Hp != H:
        x = jnp.pad(x, ((0, M_pad - M), (0, Hp - H)))

    need = (2 * tm * Hp * 4 + 2 * tm * Pp * 4                 # double-buffered act tiles
            + (L * Hp * Hp + Hp * Dhp + Dhp * Pp) * 2         # single-buffered bf16 weights
            + ((L + 2) * Hp + 3 * Dhp + 3 * Pp) * 4)          # bias / LN vectors
    cost = pl.CostEstimate(
        flops=int(2 * M_pad * (L * Hp * Hp + Hp * Dhp + Dhp * Pp)),
        transcendentals=int(M_pad * (Dhp + 4)),
        bytes_accessed=int(M_pad * (Hp + Pp) * 4 + need))

    kernel = functools.partial(
        clip_tower_kernel, num_layers=L, true_h=dims['H'], true_dh=dims['Dh'],
        true_p=dims['P'], enc_eps=enc_eps, proj_eps=proj_eps, l2_eps=l2_eps)

    const = dict(pipeline_mode=pl.Buffered(1))  # weights never change across steps
    out = pl.pallas_call(
        kernel,
        out_shape=jax.ShapeDtypeStruct((M_pad, Pp), x.dtype),
        grid_spec=pltpu.PrefetchScalarGridSpec(
            num_scalar_prefetch=0,
            grid=(M_pad // tm,),
            in_specs=[
                pl.BlockSpec((tm, Hp), lambda i: (i, 0)),            # row tile
                pl.BlockSpec((L, Hp, Hp), lambda i: (0, 0, 0), **const),
                pl.BlockSpec((L + 2, Hp), lambda i: (0, 0), **const),
                pl.BlockSpec((Hp, Dhp), lambda i: (0, 0), **const),
                pl.BlockSpec((3, Dhp), lambda i: (0, 0), **const),
                pl.BlockSpec((Dhp, Pp), lambda i: (0, 0), **const),
                pl.BlockSpec((3, Pp), lambda i: (0, 0), **const),
            ],
            out_specs=pl.BlockSpec((tm, Pp), lambda i: (i, 0)),      # lane-dense
        ),
        compiler_params=pltpu.CompilerParams(
            # TODO(synk): verify "parallel" shards the row axis across v7x's
            # two TensorCores; if not, switch to pltpu.CORE_PARALLEL.
            dimension_semantics=("parallel",),
            vmem_limit_bytes=_vmem_limit(need)),
        cost_estimate=cost,
    )(x, tw['enc_w'], tw['enc_vec'], tw['p1_w'], tw['p1_vec'],
      tw['p2_w'], tw['p2_vec'])
    return out[:M] if M_pad != M else out


# ---------------------------------------------------------------------------
# Kernel 2: tiled scaled similarity logits
# ---------------------------------------------------------------------------
def clip_logits_kernel(scale_ref, r_ref, p_ref, o_ref):
    logits = jax.lax.dot_general(
        r_ref[...].astype(jnp.float32), p_ref[...].astype(jnp.float32),
        (((1,), (1,)), ((), ())), preferred_element_type=jnp.float32)
    o_ref[...] = (logits * scale_ref[0]).astype(o_ref.dtype)


def clip_logits(rna_embeds, protein_embeds, logit_scale, *, max_tile=256):
    """rna_embeds: (n_r, K), protein_embeds: (n_p, K).  K is the lane-padded
    embedding width (padded lanes are 0, so the dot over K is exact).
    Returns (n_r, n_p) scaled similarity logits."""
    n_r, K = rna_embeds.shape
    n_p = protein_embeds.shape[0]

    tr = int(min(max_tile, _round_up(n_r, 8)))
    tp = int(min(max_tile, _round_up(n_p, _LANE)))   # lane-dense output stores
    nr_pad = _round_up(n_r, tr)
    np_pad = _round_up(n_p, tp)
    r = jnp.pad(rna_embeds, ((0, nr_pad - n_r), (0, 0))) if nr_pad != n_r else rna_embeds
    p = jnp.pad(protein_embeds, ((0, np_pad - n_p), (0, 0))) if np_pad != n_p else protein_embeds
    scale = jnp.exp(logit_scale).astype(jnp.float32).reshape((1,))

    need = 2 * (tr + tp) * K * 4 + 2 * tr * tp * 4
    cost = pl.CostEstimate(
        flops=int(2 * nr_pad * np_pad * K), transcendentals=0,
        bytes_accessed=int((nr_pad * K + np_pad * K + nr_pad * np_pad) * 4))

    out = pl.pallas_call(
        clip_logits_kernel,
        out_shape=jax.ShapeDtypeStruct((nr_pad, np_pad), rna_embeds.dtype),
        grid_spec=pltpu.PrefetchScalarGridSpec(
            num_scalar_prefetch=1,                    # exp(logit_scale) -> SMEM
            grid=(nr_pad // tr, np_pad // tp),
            in_specs=[pl.BlockSpec((tr, K), lambda i, j, s: (i, 0)),
                      pl.BlockSpec((tp, K), lambda i, j, s: (j, 0))],
            out_specs=pl.BlockSpec((tr, tp), lambda i, j, s: (i, j)),
        ),
        compiler_params=pltpu.CompilerParams(
            dimension_semantics=("parallel", "parallel"),
            vmem_limit_bytes=_vmem_limit(need)),
        cost_estimate=cost,
    )(scale, r, p)
    return out[:n_r, :n_p]


# ---------------------------------------------------------------------------
# Parameter setup (PyTorch conventions) + one-time kernel-layout preparation
# ---------------------------------------------------------------------------
def _tower_raw_params(key, hidden, num_layers, proj_hidden, proj_out):
    # PyTorch layouts: Linear weight (out, in); LayerNorm weight/bias (dim,).
    ks = jax.random.split(key, 12)
    bh = hidden ** -0.5
    bp = proj_hidden ** -0.5
    return dict(
        enc_W=jax.random.uniform(ks[0], (num_layers, hidden, hidden), jnp.float32, -bh, bh),
        enc_b=jax.random.uniform(ks[1], (num_layers, hidden), jnp.float32, -bh, bh),
        enc_g=1.0 + 0.1 * jax.random.normal(ks[2], (hidden,), jnp.float32),
        enc_be=0.05 * jax.random.normal(ks[3], (hidden,), jnp.float32),
        p1_W=jax.random.uniform(ks[4], (proj_hidden, hidden), jnp.float32, -bh, bh),
        p1_b=jax.random.uniform(ks[5], (proj_hidden,), jnp.float32, -bh, bh),
        p1_g=1.0 + 0.1 * jax.random.normal(ks[6], (proj_hidden,), jnp.float32),
        p1_be=0.05 * jax.random.normal(ks[7], (proj_hidden,), jnp.float32),
        p2_W=jax.random.uniform(ks[8], (proj_out, proj_hidden), jnp.float32, -bp, bp),
        p2_b=jax.random.uniform(ks[9], (proj_out,), jnp.float32, -bp, bp),
        p2_g=1.0 + 0.1 * jax.random.normal(ks[10], (proj_out,), jnp.float32),
        p2_be=0.05 * jax.random.normal(ks[11], (proj_out,), jnp.float32),
    )


def prepare_kernel_params(raw):
    """One-time layout prep (hoisted out of the forward call):
      * transpose PyTorch (out, in) Linear weights to (in, out),
      * zero-pad every feature dim up to a multiple of 128 lanes,
      * cast matmul weights to bf16 (MXU native; f32 accumulation in-kernel),
      * fold bias / LN gamma / LN beta into single small f32 operands.
    Returns (kernel_params, static_meta); static_meta carries the true
    (unpadded) dims needed for mask-aware LayerNorm statistics."""
    def pad2(a, rows, cols):
        return jnp.pad(a, ((0, rows - a.shape[0]), (0, cols - a.shape[1])))

    def tower(t):
        L, H, _ = t['enc_W'].shape
        Dh = t['p1_W'].shape[0]
        P = t['p2_W'].shape[0]
        Hp, Dhp, Pp = (_round_up(d, _LANE) for d in (H, Dh, P))
        enc_w = jnp.pad(jnp.transpose(t['enc_W'], (0, 2, 1)),
                        ((0, 0), (0, Hp - H), (0, Hp - H))).astype(jnp.bfloat16)
        enc_vec = pad2(jnp.concatenate(
            [t['enc_b'], t['enc_g'][None, :], t['enc_be'][None, :]], axis=0),
            L + 2, Hp)
        p1_w = pad2(t['p1_W'].T, Hp, Dhp).astype(jnp.bfloat16)
        p1_vec = pad2(jnp.stack([t['p1_b'], t['p1_g'], t['p1_be']], axis=0), 3, Dhp)
        p2_w = pad2(t['p2_W'].T, Dhp, Pp).astype(jnp.bfloat16)
        p2_vec = pad2(jnp.stack([t['p2_b'], t['p2_g'], t['p2_be']], axis=0), 3, Pp)
        return (dict(enc_w=enc_w, enc_vec=enc_vec, p1_w=p1_w, p1_vec=p1_vec,
                     p2_w=p2_w, p2_vec=p2_vec),
                dict(H=H, Dh=Dh, P=P))

    rna_p, rna_m = tower(raw['rna'])
    prot_p, prot_m = tower(raw['protein'])
    params = dict(rna=rna_p, protein=prot_p, logit_scale=raw['logit_scale'])
    meta = dict(rna=rna_m, protein=prot_m)
    return params, meta


def rna_protein_clip_forward(kp, rna_values, protein_values, *, meta,
                             layer_norm_eps=1e-5):
    rna_full = clip_tower(rna_values, kp['rna'], meta['rna'], enc_eps=layer_norm_eps)
    prot_full = clip_tower(protein_values, kp['protein'], meta['protein'],
                           enc_eps=layer_norm_eps)
    # Padded lanes of the tower outputs are exactly 0 -> feed the lane-padded
    # slabs straight into the logits matmul (K=128 keeps the MXU full).
    logits = clip_logits(rna_full, prot_full, kp['logit_scale'])
    return {'logits_per_rna_protein': logits,
            'rna_embeds': rna_full[:, :meta['rna']['P']],
            'protein_embeds': prot_full[:, :meta['protein']['P']]}


# ---------------------------------------------------------------------------
# Pure-JAX references
# ---------------------------------------------------------------------------
def _ref_layernorm(x, g, b, eps):
    m = x.mean(-1, keepdims=True)
    v = ((x - m) ** 2).mean(-1, keepdims=True)
    return (x - m) / jnp.sqrt(v + eps) * g + b


def _gelu_exact(x):
    return 0.5 * x * (1.0 + jax.scipy.special.erf(x * 0.7071067811865476))


def _reference_tower(x, t, enc_eps, proj_eps, l2_eps, *, bf16_dots, exact_gelu):
    def mm(a, w_torch):                 # w_torch: PyTorch (out, in)
        w = w_torch.T
        if bf16_dots:
            return jnp.dot(a.astype(jnp.bfloat16), w.astype(jnp.bfloat16),
                           preferred_element_type=jnp.float32)
        return a @ w
    for l in range(t['enc_W'].shape[0]):
        x = jax.nn.relu(mm(x, t['enc_W'][l]) + t['enc_b'][l])
    x = _ref_layernorm(x, t['enc_g'], t['enc_be'], enc_eps)
    h = mm(x, t['p1_W']) + t['p1_b']
    h = _ref_layernorm(h, t['p1_g'], t['p1_be'], proj_eps)
    h = _gelu_exact(h) if exact_gelu else _gelu_tanh(h)
    z = mm(h, t['p2_W']) + t['p2_b']
    z = _ref_layernorm(z, t['p2_g'], t['p2_be'], proj_eps)
    n = jnp.sqrt(jnp.sum(z * z, axis=-1, keepdims=True))
    return z / jnp.maximum(n, l2_eps)


def reference_forward(raw, rna_values, protein_values, *, layer_norm_eps=1e-5,
                      bf16_dots=False, exact_gelu=True):
    rna_e = _reference_tower(rna_values, raw['rna'], layer_norm_eps, 1e-5, 1e-12,
                             bf16_dots=bf16_dots, exact_gelu=exact_gelu)
    prot_e = _reference_tower(protein_values, raw['protein'], layer_norm_eps,
                              1e-5, 1e-12, bf16_dots=bf16_dots, exact_gelu=exact_gelu)
    logits = rna_e @ prot_e.T * jnp.exp(raw['logit_scale'])
    return {'logits_per_rna_protein': logits,
            'rna_embeds': rna_e, 'protein_embeds': prot_e}


if __name__ == "__main__":
    cfg = dict(rna_hidden=32, protein_hidden=64, rna_layers=3, protein_layers=2,
               projection_dim=32, layer_norm_eps=1e-5, logit_scale_init=2.6592)

    key = jax.random.PRNGKey(0)
    k_rna, k_prot, k_x1, k_x2 = jax.random.split(key, 4)
    raw = dict(
        rna=_tower_raw_params(k_rna, cfg['rna_hidden'], cfg['rna_layers'],
                              2 * cfg['projection_dim'], cfg['projection_dim']),
        protein=_tower_raw_params(k_prot, cfg['protein_hidden'], cfg['protein_layers'],
                                  2 * cfg['projection_dim'], cfg['projection_dim']),
        logit_scale=jnp.float32(cfg['logit_scale_init']),
    )
    kparams, meta = prepare_kernel_params(raw)   # one-time pad/transpose/bf16 prep

    batch = 10   # not a multiple of the row tile -> exercises row padding + slicing
    rna_values = jax.random.normal(k_x1, (batch, cfg['rna_hidden']), jnp.float32)
    protein_values = jax.random.normal(k_x2, (batch, cfg['protein_hidden']), jnp.float32)

    fwd = jax.jit(functools.partial(rna_protein_clip_forward, meta=meta,
                                    layer_norm_eps=cfg['layer_norm_eps']))
    out = jax.block_until_ready(fwd(kparams, rna_values, protein_values))

    assert out['rna_embeds'].shape == (batch, cfg['projection_dim'])
    assert out['protein_embeds'].shape == (batch, cfg['projection_dim'])
    assert out['logits_per_rna_protein'].shape == (batch, batch)

    # Tight check vs a pure-JAX reference that mirrors the kernel's precision
    # policy (bf16 dot operands, f32 accumulation, tanh GELU).
    ref_k = reference_forward(raw, rna_values, protein_values,
                              layer_norm_eps=cfg['layer_norm_eps'],
                              bf16_dots=True, exact_gelu=False)
    for name, tol in (('rna_embeds', 2e-3), ('protein_embeds', 2e-3),
                      ('logits_per_rna_protein', 1e-2)):
        assert jnp.allclose(out[name], ref_k[name], atol=tol, rtol=tol), f"mismatch: {name}"

    # Loose sanity check vs the exact PyTorch semantics (f32 weights, erf
    # GELU): the only deviations are the deliberate bf16 matmul policy and the
    # tanh GELU approximation.
    ref_f32 = reference_forward(raw, rna_values, protein_values,
                                layer_norm_eps=cfg['layer_norm_eps'],
                                bf16_dots=False, exact_gelu=True)
    for name in ('rna_embeds', 'protein_embeds'):
        assert jnp.allclose(out[name], ref_f32[name], atol=2.5e-2), f"drift: {name}"

    print("KERNEL_OK")
</pallas_src>

<mosaic_0001>
module attributes {stable_mosaic.version = 11 : i64} {
  func.func @clip_tower_kernel(%arg0: i32, %arg1: memref<16x128xf32, #tpu.memory_space<vmem>>, %arg2: memref<3x128x128xbf16, #tpu.memory_space<vmem>>, %arg3: memref<5x128xf32, #tpu.memory_space<vmem>>, %arg4: memref<128x128xbf16, #tpu.memory_space<vmem>>, %arg5: memref<3x128xf32, #tpu.memory_space<vmem>>, %arg6: memref<128x128xbf16, #tpu.memory_space<vmem>>, %arg7: memref<3x128xf32, #tpu.memory_space<vmem>>, %arg8: memref<16x128xf32, #tpu.memory_space<vmem>>) attributes {dimension_semantics = [#tpu.dimension_semantics<parallel>], iteration_bounds = array<i64: 1>, scalar_prefetch = 0 : i64, scratch_operands = 0 : i64, tpu.core_type = #tpu.core_type<tc>, window_params = [{transform_indices = @transform_0, window_bounds = array<i64: 16, 128>}, {pipeline_mode = #tpu.pipeline_mode<synchronous>, transform_indices = @transform_1, window_bounds = array<i64: 3, 128, 128>}, {pipeline_mode = #tpu.pipeline_mode<synchronous>, transform_indices = @transform_2, window_bounds = array<i64: 5, 128>}, {pipeline_mode = #tpu.pipeline_mode<synchronous>, transform_indices = @transform_3, window_bounds = array<i64: 128, 128>}, {pipeline_mode = #tpu.pipeline_mode<synchronous>, transform_indices = @transform_4, window_bounds = array<i64: 3, 128>}, {pipeline_mode = #tpu.pipeline_mode<synchronous>, transform_indices = @transform_5, window_bounds = array<i64: 128, 128>}, {pipeline_mode = #tpu.pipeline_mode<synchronous>, transform_indices = @transform_6, window_bounds = array<i64: 3, 128>}, {transform_indices = @transform_7, window_bounds = array<i64: 16, 128>}]} {
    %c0 = arith.constant 0 : index
    %c0_0 = arith.constant 0 : index
    %0 = vector.load %arg3[%c0, %c0_0] : memref<5x128xf32, #tpu.memory_space<vmem>>, vector<5x128xf32>
    %c0_1 = arith.constant 0 : index
    %c0_2 = arith.constant 0 : index
    %1 = vector.load %arg1[%c0_1, %c0_2] : memref<16x128xf32, #tpu.memory_space<vmem>>, vector<16x128xf32>
    %c0_3 = arith.constant 0 : index
    %c0_4 = arith.constant 0 : index
    %c0_5 = arith.constant 0 : index
    %2 = vector.load %arg2[%c0_3, %c0_4, %c0_5] : memref<3x128x128xbf16, #tpu.memory_space<vmem>>, vector<1x128x128xbf16>
    %3 = vector.shape_cast %2 : vector<1x128x128xbf16> to vector<128x128xbf16>
    %4 = arith.truncf %1 : vector<16x128xf32> to vector<16x128xbf16>
    %cst = arith.constant dense<0.000000e+00> : vector<16x128xf32>
    %5 = tpu.matmul %4, %3, %cst {dimension_numbers = #tpu.dot_dimension_numbers<[1], [0], [0], [1], [0, 0, 1, 1], [], []>} : vector<16x128xbf16>, vector<128x128xbf16>, vector<16x128xf32> -> vector<16x128xf32>
    %6 = vector.extract_strided_slice %0 {offsets = [0, 0], sizes = [1, 128], strides = [1, 1]} : vector<5x128xf32> to vector<1x128xf32>
    %7 = vector.broadcast %6 : vector<1x128xf32> to vector<16x128xf32>
    %8 = arith.addf %5, %7 : vector<16x128xf32>
    %cst_6 = arith.constant 0.000000e+00 : f32
    %9 = vector.broadcast %cst_6 : f32 to vector<16x128xf32>
    %10 = arith.maximumf %8, %9 : vector<16x128xf32>
    %c1 = arith.constant 1 : index
    %c0_7 = arith.constant 0 : index
    %c0_8 = arith.constant 0 : index
    %11 = vector.load %arg2[%c1, %c0_7, %c0_8] : memref<3x128x128xbf16, #tpu.memory_space<vmem>>, vector<1x128x128xbf16>
    %12 = vector.shape_cast %11 : vector<1x128x128xbf16> to vector<128x128xbf16>
    %13 = arith.truncf %10 : vector<16x128xf32> to vector<16x128xbf16>
    %cst_9 = arith.constant dense<0.000000e+00> : vector<16x128xf32>
    %14 = tpu.matmul %13, %12, %cst_9 {dimension_numbers = #tpu.dot_dimension_numbers<[1], [0], [0], [1], [0, 0, 1, 1], [], []>} : vector<16x128xbf16>, vector<128x128xbf16>, vector<16x128xf32> -> vector<16x128xf32>
    %15 = vector.extract_strided_slice %0 {offsets = [1, 0], sizes = [1, 128], strides = [1, 1]} : vector<5x128xf32> to vector<1x128xf32>
    %16 = vector.broadcast %15 : vector<1x128xf32> to vector<16x128xf32>
    %17 = arith.addf %14, %16 : vector<16x128xf32>
    %cst_10 = arith.constant 0.000000e+00 : f32
    %18 = vector.broadcast %cst_10 : f32 to vector<16x128xf32>
    %19 = arith.maximumf %17, %18 : vector<16x128xf32>
    %c2 = arith.constant 2 : index
    %c0_11 = arith.constant 0 : index
    %c0_12 = arith.constant 0 : index
    %20 = vector.load %arg2[%c2, %c0_11, %c0_12] : memref<3x128x128xbf16, #tpu.memory_space<vmem>>, vector<1x128x128xbf16>
    %21 = vector.shape_cast %20 : vector<1x128x128xbf16> to vector<128x128xbf16>
    %22 = arith.truncf %19 : vector<16x128xf32> to vector<16x128xbf16>
    %cst_13 = arith.constant dense<0.000000e+00> : vector<16x128xf32>
    %23 = tpu.matmul %22, %21, %cst_13 {dimension_numbers = #tpu.dot_dimension_numbers<[1], [0], [0], [1], [0, 0, 1, 1], [], []>} : vector<16x128xbf16>, vector<128x128xbf16>, vector<16x128xf32> -> vector<16x128xf32>
    %24 = vector.extract_strided_slice %0 {offsets = [2, 0], sizes = [1, 128], strides = [1, 1]} : vector<5x128xf32> to vector<1x128xf32>
    %25 = vector.broadcast %24 : vector<1x128xf32> to vector<16x128xf32>
    %26 = arith.addf %23, %25 : vector<16x128xf32>
    %cst_14 = arith.constant 0.000000e+00 : f32
    %27 = vector.broadcast %cst_14 : f32 to vector<16x128xf32>
    %28 = arith.maximumf %26, %27 : vector<16x128xf32>
    %29 = vector.extract_strided_slice %0 {offsets = [3, 0], sizes = [1, 128], strides = [1, 1]} : vector<5x128xf32> to vector<1x128xf32>
    %30 = vector.extract_strided_slice %0 {offsets = [4, 0], sizes = [1, 128], strides = [1, 1]} : vector<5x128xf32> to vector<1x128xf32>
    %cst_15 = arith.constant dense<0.000000e+00> : vector<16xf32>
    %31 = vector.multi_reduction <add>, %28, %cst_15 [1] : vector<16x128xf32> to vector<16xf32>
    %32 = vector.shape_cast %31 : vector<16xf32> to vector<16x1xf32>
    %cst_16 = arith.constant 3.125000e-02 : f32
    %33 = vector.broadcast %cst_16 : f32 to vector<16x1xf32>
    %34 = arith.mulf %32, %33 : vector<16x1xf32>
    %35 = vector.broadcast %34 : vector<16x1xf32> to vector<16x128xf32>
    %36 = arith.subf %28, %35 : vector<16x128xf32>
    %37 = tpu.iota {dimensions = array<i32: 1>} : vector<1x128xi32>
    %c32_i32 = arith.constant 32 : i32
    %38 = vector.broadcast %c32_i32 : i32 to vector<1x128xi32>
    %39 = arith.cmpi slt, %37, %38 : vector<1x128xi32>
    %40 = arith.extui %39 : vector<1x128xi1> to vector<1x128xi32>
    %41 = arith.sitofp %40 : vector<1x128xi32> to vector<1x128xf32>
    %42 = vector.broadcast %41 : vector<1x128xf32> to vector<16x128xf32>
    %43 = arith.mulf %36, %42 : vector<16x128xf32>
    %44 = arith.mulf %43, %43 : vector<16x128xf32>
    %cst_17 = arith.constant dense<0.000000e+00> : vector<16xf32>
    %45 = vector.multi_reduction <add>, %44, %cst_17 [1] : vector<16x128xf32> to vector<16xf32>
    %46 = vector.shape_cast %45 : vector<16xf32> to vector<16x1xf32>
    %cst_18 = arith.constant 3.125000e-02 : f32
    %47 = vector.broadcast %cst_18 : f32 to vector<16x1xf32>
    %48 = arith.mulf %46, %47 : vector<16x1xf32>
    %cst_19 = arith.constant 9.99999974E-6 : f32
    %49 = vector.broadcast %cst_19 : f32 to vector<16x1xf32>
    %50 = arith.addf %48, %49 : vector<16x1xf32>
    %51 = math.rsqrt %50 : vector<16x1xf32>
    %52 = vector.broadcast %51 : vector<16x1xf32> to vector<16x128xf32>
    %53 = arith.mulf %43, %52 : vector<16x128xf32>
    %54 = vector.broadcast %29 : vector<1x128xf32> to vector<16x128xf32>
    %55 = arith.mulf %53, %54 : vector<16x128xf32>
    %56 = vector.broadcast %30 : vector<1x128xf32> to vector<16x128xf32>
    %57 = arith.addf %55, %56 : vector<16x128xf32>
    %c0_20 = arith.constant 0 : index
    %c0_21 = arith.constant 0 : index
    %58 = vector.load %arg5[%c0_20, %c0_21] : memref<3x128xf32, #tpu.memory_space<vmem>>, vector<3x128xf32>
    %c0_22 = arith.constant 0 : index
    %c0_23 = arith.constant 0 : index
    %59 = vector.load %arg4[%c0_22, %c0_23] : memref<128x128xbf16, #tpu.memory_space<vmem>>, vector<128x128xbf16>
    %60 = arith.truncf %57 : vector<16x128xf32> to vector<16x128xbf16>
    %cst_24 = arith.constant dense<0.000000e+00> : vector<16x128xf32>
    %61 = tpu.matmul %60, %59, %cst_24 {dimension_numbers = #tpu.dot_dimension_numbers<[1], [0], [0], [1], [0, 0, 1, 1], [], []>} : vector<16x128xbf16>, vector<128x128xbf16>, vector<16x128xf32> -> vector<16x128xf32>
    %62 = vector.extract_strided_slice %58 {offsets = [0, 0], sizes = [1, 128], strides = [1, 1]} : vector<3x128xf32> to vector<1x128xf32>
    %63 = vector.broadcast %62 : vector<1x128xf32> to vector<16x128xf32>
    %64 = arith.addf %61, %63 : vector<16x128xf32>
    %65 = vector.extract_strided_slice %58 {offsets = [1, 0], sizes = [1, 128], strides = [1, 1]} : vector<3x128xf32> to vector<1x128xf32>
    %66 = vector.extract_strided_slice %58 {offsets = [2, 0], sizes = [1, 128], strides = [1, 1]} : vector<3x128xf32> to vector<1x128xf32>
    %cst_25 = arith.constant dense<0.000000e+00> : vector<16xf32>
    %67 = vector.multi_reduction <add>, %64, %cst_25 [1] : vector<16x128xf32> to vector<16xf32>
    %68 = vector.shape_cast %67 : vector<16xf32> to vector<16x1xf32>
    %cst_26 = arith.constant 1.562500e-02 : f32
    %69 = vector.broadcast %cst_26 : f32 to vector<16x1xf32>
    %70 = arith.mulf %68, %69 : vector<16x1xf32>
    %71 = vector.broadcast %70 : vector<16x1xf32> to vector<16x128xf32>
    %72 = arith.subf %64, %71 : vector<16x128xf32>
    %73 = tpu.iota {dimensions = array<i32: 1>} : vector<1x128xi32>
    %c64_i32 = arith.constant 64 : i32
    %74 = vector.broadcast %c64_i32 : i32 to vector<1x128xi32>
    %75 = arith.cmpi slt, %73, %74 : vector<1x128xi32>
    %76 = arith.extui %75 : vector<1x128xi1> to vector<1x128xi32>
    %77 = arith.sitofp %76 : vector<1x128xi32> to vector<1x128xf32>
    %78 = vector.broadcast %77 : vector<1x128xf32> to vector<16x128xf32>
    %79 = arith.mulf %72, %78 : vector<16x128xf32>
    %80 = arith.mulf %79, %79 : vector<16x128xf32>
    %cst_27 = arith.constant dense<0.000000e+00> : vector<16xf32>
    %81 = vector.multi_reduction <add>, %80, %cst_27 [1] : vector<16x128xf32> to vector<16xf32>
    %82 = vector.shape_cast %81 : vector<16xf32> to vector<16x1xf32>
    %cst_28 = arith.constant 1.562500e-02 : f32
    %83 = vector.broadcast %cst_28 : f32 to vector<16x1xf32>
    %84 = arith.mulf %82, %83 : vector<16x1xf32>
    %cst_29 = arith.constant 9.99999974E-6 : f32
    %85 = vector.broadcast %cst_29 : f32 to vector<16x1xf32>
    %86 = arith.addf %84, %85 : vector<16x1xf32>
    %87 = math.rsqrt %86 : vector<16x1xf32>
    %88 = vector.broadcast %87 : vector<16x1xf32> to vector<16x128xf32>
    %89 = arith.mulf %79, %88 : vector<16x128xf32>
    %90 = vector.broadcast %65 : vector<1x128xf32> to vector<16x128xf32>
    %91 = arith.mulf %89, %90 : vector<16x128xf32>
    %92 = vector.broadcast %66 : vector<1x128xf32> to vector<16x128xf32>
    %93 = arith.addf %91, %92 : vector<16x128xf32>
    %cst_30 = arith.constant 5.000000e-01 : f32
    %94 = vector.broadcast %cst_30 : f32 to vector<16x128xf32>
    %95 = arith.mulf %94, %93 : vector<16x128xf32>
    %cst_31 = arith.constant 4.471500e-02 : f32
    %96 = vector.broadcast %cst_31 : f32 to vector<16x128xf32>
    %97 = arith.mulf %96, %93 : vector<16x128xf32>
    %98 = arith.mulf %97, %93 : vector<16x128xf32>
    %99 = arith.mulf %98, %93 : vector<16x128xf32>
    %100 = arith.addf %93, %99 : vector<16x128xf32>
    %cst_32 = arith.constant 0.797884583 : f32
    %101 = vector.broadcast %cst_32 : f32 to vector<16x128xf32>
    %102 = arith.mulf %101, %100 : vector<16x128xf32>
    %103 = math.tanh %102 : vector<16x128xf32>
    %cst_33 = arith.constant 1.000000e+00 : f32
    %104 = vector.broadcast %cst_33 : f32 to vector<16x128xf32>
    %105 = arith.addf %104, %103 : vector<16x128xf32>
    %106 = arith.mulf %95, %105 : vector<16x128xf32>
    %c0_34 = arith.constant 0 : index
    %c0_35 = arith.constant 0 : index
    %107 = vector.load %arg7[%c0_34, %c0_35] : memref<3x128xf32, #tpu.memory_space<vmem>>, vector<3x128xf32>
    %c0_36 = arith.constant 0 : index
    %c0_37 = arith.constant 0 : index
    %108 = vector.load %arg6[%c0_36, %c0_37] : memref<128x128xbf16, #tpu.memory_space<vmem>>, vector<128x128xbf16>
    %109 = arith.truncf %106 : vector<16x128xf32> to vector<16x128xbf16>
    %cst_38 = arith.constant dense<0.000000e+00> : vector<16x128xf32>
    %110 = tpu.matmul %109, %108, %cst_38 {dimension_numbers = #tpu.dot_dimension_numbers<[1], [0], [0], [1], [0, 0, 1, 1], [], []>} : vector<16x128xbf16>, vector<128x128xbf16>, vector<16x128xf32> -> vector<16x128xf32>
    %111 = vector.extract_strided_slice %107 {offsets = [0, 0], sizes = [1, 128], strides = [1, 1]} : vector<3x128xf32> to vector<1x128xf32>
    %112 = vector.broadcast %111 : vector<1x128xf32> to vector<16x128xf32>
    %113 = arith.addf %110, %112 : vector<16x128xf32>
    %114 = vector.extract_strided_slice %107 {offsets = [1, 0], sizes = [1, 128], strides = [1, 1]} : vector<3x128xf32> to vector<1x128xf32>
    %115 = vector.extract_strided_slice %107 {offsets = [2, 0], sizes = [1, 128], strides = [1, 1]} : vector<3x128xf32> to vector<1x128xf32>
    %cst_39 = arith.constant dense<0.000000e+00> : vector<16xf32>
    %116 = vector.multi_reduction <add>, %113, %cst_39 [1] : vector<16x128xf32> to vector<16xf32>
    %117 = vector.shape_cast %116 : vector<16xf32> to vector<16x1xf32>
    %cst_40 = arith.constant 3.125000e-02 : f32
    %118 = vector.broadcast %cst_40 : f32 to vector<16x1xf32>
    %119 = arith.mulf %117, %118 : vector<16x1xf32>
    %120 = vector.broadcast %119 : vector<16x1xf32> to vector<16x128xf32>
    %121 = arith.subf %113, %120 : vector<16x128xf32>
    %122 = tpu.iota {dimensions = array<i32: 1>} : vector<1x128xi32>
    %c32_i32_41 = arith.constant 32 : i32
    %123 = vector.broadcast %c32_i32_41 : i32 to vector<1x128xi32>
    %124 = arith.cmpi slt, %122, %123 : vector<1x128xi32>
    %125 = arith.extui %124 : vector<1x128xi1> to vector<1x128xi32>
    %126 = arith.sitofp %125 : vector<1x128xi32> to vector<1x128xf32>
    %127 = vector.broadcast %126 : vector<1x128xf32> to vector<16x128xf32>
    %128 = arith.mulf %121, %127 : vector<16x128xf32>
    %129 = arith.mulf %128, %128 : vector<16x128xf32>
    %cst_42 = arith.constant dense<0.000000e+00> : vector<16xf32>
    %130 = vector.multi_reduction <add>, %129, %cst_42 [1] : vector<16x128xf32> to vector<16xf32>
    %131 = vector.shape_cast %130 : vector<16xf32> to vector<16x1xf32>
    %cst_43 = arith.constant 3.125000e-02 : f32
    %132 = vector.broadcast %cst_43 : f32 to vector<16x1xf32>
    %133 = arith.mulf %131, %132 : vector<16x1xf32>
    %cst_44 = arith.constant 9.99999974E-6 : f32
    %134 = vector.broadcast %cst_44 : f32 to vector<16x1xf32>
    %135 = arith.addf %133, %134 : vector<16x1xf32>
    %136 = math.rsqrt %135 : vector<16x1xf32>
    %137 = vector.broadcast %136 : vector<16x1xf32> to vector<16x128xf32>
    %138 = arith.mulf %128, %137 : vector<16x128xf32>
    %139 = vector.broadcast %114 : vector<1x128xf32> to vector<16x128xf32>
    %140 = arith.mulf %138, %139 : vector<16x128xf32>
    %141 = vector.broadcast %115 : vector<1x128xf32> to vector<16x128xf32>
    %142 = arith.addf %140, %141 : vector<16x128xf32>
    %143 = arith.mulf %142, %142 : vector<16x128xf32>
    %cst_45 = arith.constant dense<0.000000e+00> : vector<16xf32>
    %144 = vector.multi_reduction <add>, %143, %cst_45 [1] : vector<16x128xf32> to vector<16xf32>
    %145 = vector.shape_cast %144 : vector<16xf32> to vector<16x1xf32>
    %cst_46 = arith.constant 1.000000e-24 : f32
    %146 = vector.broadcast %cst_46 : f32 to vector<16x1xf32>
    %147 = arith.maximumf %145, %146 : vector<16x1xf32>
    %148 = math.rsqrt %147 : vector<16x1xf32>
    %149 = vector.broadcast %148 : vector<16x1xf32> to vector<16x128xf32>
    %150 = arith.mulf %142, %149 : vector<16x128xf32>
    %c0_47 = arith.constant 0 : index
    %c0_48 = arith.constant 0 : index
    %151 = vector.load %arg8[%c0_47, %c0_48] : memref<16x128xf32, #tpu.memory_space<vmem>>, vector<16x128xf32>
    tpu.vector_store %arg8[%c0_47, %c0_48], %150 {strides = array<i32>} : memref<16x128xf32, #tpu.memory_space<vmem>>, vector<16x128xf32>,
    return
  }
  func.func @transform_0(%arg0: i32) -> (i32, i32) {
    %c0_i32 = arith.constant 0 : i32
    %c0_i32_0 = arith.constant 0 : i32
    return %arg0, %c0_i32 : i32, i32
  }
  func.func @transform_1(%arg0: i32) -> (i32, i32, i32) {
    %c0_i32 = arith.constant 0 : i32
    %c0_i32_0 = arith.constant 0 : i32
    %c0_i32_1 = arith.constant 0 : i32
    %c0_i32_2 = arith.constant 0 : i32
    return %c0_i32, %c0_i32_0, %c0_i32_1 : i32, i32, i32
  }
  func.func @transform_2(%arg0: i32) -> (i32, i32) {
    %c0_i32 = arith.constant 0 : i32
    %c0_i32_0 = arith.constant 0 : i32
    %c0_i32_1 = arith.constant 0 : i32
    return %c0_i32, %c0_i32_0 : i32, i32
  }
  func.func @transform_3(%arg0: i32) -> (i32, i32) {
    %c0_i32 = arith.constant 0 : i32
    %c0_i32_0 = arith.constant 0 : i32
    %c0_i32_1 = arith.constant 0 : i32
    return %c0_i32, %c0_i32_0 : i32, i32
  }
  func.func @transform_4(%arg0: i32) -> (i32, i32) {
    %c0_i32 = arith.constant 0 : i32
    %c0_i32_0 = arith.constant 0 : i32
    %c0_i32_1 = arith.constant 0 : i32
    return %c0_i32, %c0_i32_0 : i32, i32
  }
  func.func @transform_5(%arg0: i32) -> (i32, i32) {
    %c0_i32 = arith.constant 0 : i32
    %c0_i32_0 = arith.constant 0 : i32
    %c0_i32_1 = arith.constant 0 : i32
    return %c0_i32, %c0_i32_0 : i32, i32
  }
  func.func @transform_6(%arg0: i32) -> (i32, i32) {
    %c0_i32 = arith.constant 0 : i32
    %c0_i32_0 = arith.constant 0 : i32
    %c0_i32_1 = arith.constant 0 : i32
    return %c0_i32, %c0_i32_0 : i32, i32
  }
  func.func @transform_7(%arg0: i32) -> (i32, i32) {
    %c0_i32 = arith.constant 0 : i32
    %c0_i32_0 = arith.constant 0 : i32
    return %arg0, %c0_i32 : i32, i32
  }
}

module attributes {stable_mosaic.version = 11 : i64} {
  func.func @clip_logits_kernel(%arg0: i32, %arg1: i32, %arg2: memref<1xf32, #tpu.memory_space<smem>>, %arg3: memref<16x128xf32, #tpu.memory_space<vmem>>, %arg4: memref<128x128xf32, #tpu.memory_space<vmem>>, %arg5: memref<16x128xf32, #tpu.memory_space<vmem>>) attributes {dimension_semantics = [#tpu.dimension_semantics<parallel>, #tpu.dimension_semantics<parallel>], iteration_bounds = array<i64: 1, 1>, scalar_prefetch = 1 : i64, scratch_operands = 0 : i64, tpu.core_type = #tpu.core_type<tc>, window_params = [{transform_indices = @transform_0, window_bounds = array<i64: 16, 128>}, {transform_indices = @transform_1, window_bounds = array<i64: 128, 128>}, {transform_indices = @transform_2, window_bounds = array<i64: 16, 128>}]} {
    %c0 = arith.constant 0 : index
    %c0_0 = arith.constant 0 : index
    %0 = vector.load %arg3[%c0, %c0_0] : memref<16x128xf32, #tpu.memory_space<vmem>>, vector<16x128xf32>
    %c0_1 = arith.constant 0 : index
    %c0_2 = arith.constant 0 : index
    %1 = vector.load %arg4[%c0_1, %c0_2] : memref<128x128xf32, #tpu.memory_space<vmem>>, vector<128x128xf32>
    %cst = arith.constant dense<0.000000e+00> : vector<16x128xf32>
    %2 = tpu.matmul %0, %1, %cst {dimension_numbers = #tpu.dot_dimension_numbers<[1], [1], [0], [0], [0, 0, 1, 0], [], []>} : vector<16x128xf32>, vector<128x128xf32>, vector<16x128xf32> -> vector<16x128xf32>
    %c0_3 = arith.constant 0 : index
    %3 = memref.load %arg2[%c0_3] : memref<1xf32, #tpu.memory_space<smem>>
    %4 = vector.broadcast %3 : f32 to vector<16x128xf32>
    %5 = arith.mulf %2, %4 : vector<16x128xf32>
    %c0_4 = arith.constant 0 : index
    %c0_5 = arith.constant 0 : index
    %6 = vector.load %arg5[%c0_4, %c0_5] : memref<16x128xf32, #tpu.memory_space<vmem>>, vector<16x128xf32>
    tpu.vector_store %arg5[%c0_4, %c0_5], %5 {strides = array<i32>} : memref<16x128xf32, #tpu.memory_space<vmem>>, vector<16x128xf32>,
    return
  }
  func.func @transform_0(%arg0: i32, %arg1: i32, %arg2: memref<1xf32, #tpu.memory_space<smem>>) -> (i32, i32) {
    %c0_i32 = arith.constant 0 : i32
    %c0_i32_0 = arith.constant 0 : i32
    return %arg0, %c0_i32 : i32, i32
  }
  func.func @transform_1(%arg0: i32, %arg1: i32, %arg2: memref<1xf32, #tpu.memory_space<smem>>) -> (i32, i32) {
    %c0_i32 = arith.constant 0 : i32
    %c0_i32_0 = arith.constant 0 : i32
    return %arg1, %c0_i32 : i32, i32
  }
  func.func @transform_2(%arg0: i32, %arg1: i32, %arg2: memref<1xf32, #tpu.memory_space<smem>>) -> (i32, i32) {
    %c0_i32 = arith.constant 0 : i32
    return %arg0, %arg1 : i32, i32
  }
}

module attributes {stable_mosaic.version = 11 : i64} {
  func.func @clip_tower_kernel(%arg0: i32, %arg1: memref<16x128xf32, #tpu.memory_space<vmem>>, %arg2: memref<2x128x128xbf16, #tpu.memory_space<vmem>>, %arg3: memref<4x128xf32, #tpu.memory_space<vmem>>, %arg4: memref<128x128xbf16, #tpu.memory_space<vmem>>, %arg5: memref<3x128xf32, #tpu.memory_space<vmem>>, %arg6: memref<128x128xbf16, #tpu.memory_space<vmem>>, %arg7: memref<3x128xf32, #tpu.memory_space<vmem>>, %arg8: memref<16x128xf32, #tpu.memory_space<vmem>>) attributes {dimension_semantics = [#tpu.dimension_semantics<parallel>], iteration_bounds = array<i64: 1>, scalar_prefetch = 0 : i64, scratch_operands = 0 : i64, tpu.core_type = #tpu.core_type<tc>, window_params = [{transform_indices = @transform_0, window_bounds = array<i64: 16, 128>}, {pipeline_mode = #tpu.pipeline_mode<synchronous>, transform_indices = @transform_1, window_bounds = array<i64: 2, 128, 128>}, {pipeline_mode = #tpu.pipeline_mode<synchronous>, transform_indices = @transform_2, window_bounds = array<i64: 4, 128>}, {pipeline_mode = #tpu.pipeline_mode<synchronous>, transform_indices = @transform_3, window_bounds = array<i64: 128, 128>}, {pipeline_mode = #tpu.pipeline_mode<synchronous>, transform_indices = @transform_4, window_bounds = array<i64: 3, 128>}, {pipeline_mode = #tpu.pipeline_mode<synchronous>, transform_indices = @transform_5, window_bounds = array<i64: 128, 128>}, {pipeline_mode = #tpu.pipeline_mode<synchronous>, transform_indices = @transform_6, window_bounds = array<i64: 3, 128>}, {transform_indices = @transform_7, window_bounds = array<i64: 16, 128>}]} {
    %c0 = arith.constant 0 : index
    %c0_0 = arith.constant 0 : index
    %0 = vector.load %arg3[%c0, %c0_0] : memref<4x128xf32, #tpu.memory_space<vmem>>, vector<4x128xf32>
    %c0_1 = arith.constant 0 : index
    %c0_2 = arith.constant 0 : index
    %1 = vector.load %arg1[%c0_1, %c0_2] : memref<16x128xf32, #tpu.memory_space<vmem>>, vector<16x128xf32>
    %c0_3 = arith.constant 0 : index
    %c0_4 = arith.constant 0 : index
    %c0_5 = arith.constant 0 : index
    %2 = vector.load %arg2[%c0_3, %c0_4, %c0_5] : memref<2x128x128xbf16, #tpu.memory_space<vmem>>, vector<1x128x128xbf16>
    %3 = vector.shape_cast %2 : vector<1x128x128xbf16> to vector<128x128xbf16>
    %4 = arith.truncf %1 : vector<16x128xf32> to vector<16x128xbf16>
    %cst = arith.constant dense<0.000000e+00> : vector<16x128xf32>
    %5 = tpu.matmul %4, %3, %cst {dimension_numbers = #tpu.dot_dimension_numbers<[1], [0], [0], [1], [0, 0, 1, 1], [], []>} : vector<16x128xbf16>, vector<128x128xbf16>, vector<16x128xf32> -> vector<16x128xf32>
    %6 = vector.extract_strided_slice %0 {offsets = [0, 0], sizes = [1, 128], strides = [1, 1]} : vector<4x128xf32> to vector<1x128xf32>
    %7 = vector.broadcast %6 : vector<1x128xf32> to vector<16x128xf32>
    %8 = arith.addf %5, %7 : vector<16x128xf32>
    %cst_6 = arith.constant 0.000000e+00 : f32
    %9 = vector.broadcast %cst_6 : f32 to vector<16x128xf32>
    %10 = arith.maximumf %8, %9 : vector<16x128xf32>
    %c1 = arith.constant 1 : index
    %c0_7 = arith.constant 0 : index
    %c0_8 = arith.constant 0 : index
    %11 = vector.load %arg2[%c1, %c0_7, %c0_8] : memref<2x128x128xbf16, #tpu.memory_space<vmem>>, vector<1x128x128xbf16>
    %12 = vector.shape_cast %11 : vector<1x128x128xbf16> to vector<128x128xbf16>
    %13 = arith.truncf %10 : vector<16x128xf32> to vector<16x128xbf16>
    %cst_9 = arith.constant dense<0.000000e+00> : vector<16x128xf32>
    %14 = tpu.matmul %13, %12, %cst_9 {dimension_numbers = #tpu.dot_dimension_numbers<[1], [0], [0], [1], [0, 0, 1, 1], [], []>} : vector<16x128xbf16>, vector<128x128xbf16>, vector<16x128xf32> -> vector<16x128xf32>
    %15 = vector.extract_strided_slice %0 {offsets = [1, 0], sizes = [1, 128], strides = [1, 1]} : vector<4x128xf32> to vector<1x128xf32>
    %16 = vector.broadcast %15 : vector<1x128xf32> to vector<16x128xf32>
    %17 = arith.addf %14, %16 : vector<16x128xf32>
    %cst_10 = arith.constant 0.000000e+00 : f32
    %18 = vector.broadcast %cst_10 : f32 to vector<16x128xf32>
    %19 = arith.maximumf %17, %18 : vector<16x128xf32>
    %20 = vector.extract_strided_slice %0 {offsets = [2, 0], sizes = [1, 128], strides = [1, 1]} : vector<4x128xf32> to vector<1x128xf32>
    %21 = vector.extract_strided_slice %0 {offsets = [3, 0], sizes = [1, 128], strides = [1, 1]} : vector<4x128xf32> to vector<1x128xf32>
    %cst_11 = arith.constant dense<0.000000e+00> : vector<16xf32>
    %22 = vector.multi_reduction <add>, %19, %cst_11 [1] : vector<16x128xf32> to vector<16xf32>
    %23 = vector.shape_cast %22 : vector<16xf32> to vector<16x1xf32>
    %cst_12 = arith.constant 1.562500e-02 : f32
    %24 = vector.broadcast %cst_12 : f32 to vector<16x1xf32>
    %25 = arith.mulf %23, %24 : vector<16x1xf32>
    %26 = vector.broadcast %25 : vector<16x1xf32> to vector<16x128xf32>
    %27 = arith.subf %19, %26 : vector<16x128xf32>
    %28 = tpu.iota {dimensions = array<i32: 1>} : vector<1x128xi32>
    %c64_i32 = arith.constant 64 : i32
    %29 = vector.broadcast %c64_i32 : i32 to vector<1x128xi32>
    %30 = arith.cmpi slt, %28, %29 : vector<1x128xi32>
    %31 = arith.extui %30 : vector<1x128xi1> to vector<1x128xi32>
    %32 = arith.sitofp %31 : vector<1x128xi32> to vector<1x128xf32>
    %33 = vector.broadcast %32 : vector<1x128xf32> to vector<16x128xf32>
    %34 = arith.mulf %27, %33 : vector<16x128xf32>
    %35 = arith.mulf %34, %34 : vector<16x128xf32>
    %cst_13 = arith.constant dense<0.000000e+00> : vector<16xf32>
    %36 = vector.multi_reduction <add>, %35, %cst_13 [1] : vector<16x128xf32> to vector<16xf32>
    %37 = vector.shape_cast %36 : vector<16xf32> to vector<16x1xf32>
    %cst_14 = arith.constant 1.562500e-02 : f32
    %38 = vector.broadcast %cst_14 : f32 to vector<16x1xf32>
    %39 = arith.mulf %37, %38 : vector<16x1xf32>
    %cst_15 = arith.constant 9.99999974E-6 : f32
    %40 = vector.broadcast %cst_15 : f32 to vector<16x1xf32>
    %41 = arith.addf %39, %40 : vector<16x1xf32>
    %42 = math.rsqrt %41 : vector<16x1xf32>
    %43 = vector.broadcast %42 : vector<16x1xf32> to vector<16x128xf32>
    %44 = arith.mulf %34, %43 : vector<16x128xf32>
    %45 = vector.broadcast %20 : vector<1x128xf32> to vector<16x128xf32>
    %46 = arith.mulf %44, %45 : vector<16x128xf32>
    %47 = vector.broadcast %21 : vector<1x128xf32> to vector<16x128xf32>
    %48 = arith.addf %46, %47 : vector<16x128xf32>
    %c0_16 = arith.constant 0 : index
    %c0_17 = arith.constant 0 : index
    %49 = vector.load %arg5[%c0_16, %c0_17] : memref<3x128xf32, #tpu.memory_space<vmem>>, vector<3x128xf32>
    %c0_18 = arith.constant 0 : index
    %c0_19 = arith.constant 0 : index
    %50 = vector.load %arg4[%c0_18, %c0_19] : memref<128x128xbf16, #tpu.memory_space<vmem>>, vector<128x128xbf16>
    %51 = arith.truncf %48 : vector<16x128xf32> to vector<16x128xbf16>
    %cst_20 = arith.constant dense<0.000000e+00> : vector<16x128xf32>
    %52 = tpu.matmul %51, %50, %cst_20 {dimension_numbers = #tpu.dot_dimension_numbers<[1], [0], [0], [1], [0, 0, 1, 1], [], []>} : vector<16x128xbf16>, vector<128x128xbf16>, vector<16x128xf32> -> vector<16x128xf32>
    %53 = vector.extract_strided_slice %49 {offsets = [0, 0], sizes = [1, 128], strides = [1, 1]} : vector<3x128xf32> to vector<1x128xf32>
    %54 = vector.broadcast %53 : vector<1x128xf32> to vector<16x128xf32>
    %55 = arith.addf %52, %54 : vector<16x128xf32>
    %56 = vector.extract_strided_slice %49 {offsets = [1, 0], sizes = [1, 128], strides = [1, 1]} : vector<3x128xf32> to vector<1x128xf32>
    %57 = vector.extract_strided_slice %49 {offsets = [2, 0], sizes = [1, 128], strides = [1, 1]} : vector<3x128xf32> to vector<1x128xf32>
    %cst_21 = arith.constant dense<0.000000e+00> : vector<16xf32>
    %58 = vector.multi_reduction <add>, %55, %cst_21 [1] : vector<16x128xf32> to vector<16xf32>
    %59 = vector.shape_cast %58 : vector<16xf32> to vector<16x1xf32>
    %cst_22 = arith.constant 1.562500e-02 : f32
    %60 = vector.broadcast %cst_22 : f32 to vector<16x1xf32>
    %61 = arith.mulf %59, %60 : vector<16x1xf32>
    %62 = vector.broadcast %61 : vector<16x1xf32> to vector<16x128xf32>
    %63 = arith.subf %55, %62 : vector<16x128xf32>
    %64 = tpu.iota {dimensions = array<i32: 1>} : vector<1x128xi32>
    %c64_i32_23 = arith.constant 64 : i32
    %65 = vector.broadcast %c64_i32_23 : i32 to vector<1x128xi32>
    %66 = arith.cmpi slt, %64, %65 : vector<1x128xi32>
    %67 = arith.extui %66 : vector<1x128xi1> to vector<1x128xi32>
    %68 = arith.sitofp %67 : vector<1x128xi32> to vector<1x128xf32>
    %69 = vector.broadcast %68 : vector<1x128xf32> to vector<16x128xf32>
    %70 = arith.mulf %63, %69 : vector<16x128xf32>
    %71 = arith.mulf %70, %70 : vector<16x128xf32>
    %cst_24 = arith.constant dense<0.000000e+00> : vector<16xf32>
    %72 = vector.multi_reduction <add>, %71, %cst_24 [1] : vector<16x128xf32> to vector<16xf32>
    %73 = vector.shape_cast %72 : vector<16xf32> to vector<16x1xf32>
    %cst_25 = arith.constant 1.562500e-02 : f32
    %74 = vector.broadcast %cst_25 : f32 to vector<16x1xf32>
    %75 = arith.mulf %73, %74 : vector<16x1xf32>
    %cst_26 = arith.constant 9.99999974E-6 : f32
    %76 = vector.broadcast %cst_26 : f32 to vector<16x1xf32>
    %77 = arith.addf %75, %76 : vector<16x1xf32>
    %78 = math.rsqrt %77 : vector<16x1xf32>
    %79 = vector.broadcast %78 : vector<16x1xf32> to vector<16x128xf32>
    %80 = arith.mulf %70, %79 : vector<16x128xf32>
    %81 = vector.broadcast %56 : vector<1x128xf32> to vector<16x128xf32>
    %82 = arith.mulf %80, %81 : vector<16x128xf32>
    %83 = vector.broadcast %57 : vector<1x128xf32> to vector<16x128xf32>
    %84 = arith.addf %82, %83 : vector<16x128xf32>
    %cst_27 = arith.constant 5.000000e-01 : f32
    %85 = vector.broadcast %cst_27 : f32 to vector<16x128xf32>
    %86 = arith.mulf %85, %84 : vector<16x128xf32>
    %cst_28 = arith.constant 4.471500e-02 : f32
    %87 = vector.broadcast %cst_28 : f32 to vector<16x128xf32>
    %88 = arith.mulf %87, %84 : vector<16x128xf32>
    %89 = arith.mulf %88, %84 : vector<16x128xf32>
    %90 = arith.mulf %89, %84 : vector<16x128xf32>
    %91 = arith.addf %84, %90 : vector<16x128xf32>
    %cst_29 = arith.constant 0.797884583 : f32
    %92 = vector.broadcast %cst_29 : f32 to vector<16x128xf32>
    %93 = arith.mulf %92, %91 : vector<16x128xf32>
    %94 = math.tanh %93 : vector<16x128xf32>
    %cst_30 = arith.constant 1.000000e+00 : f32
    %95 = vector.broadcast %cst_30 : f32 to vector<16x128xf32>
    %96 = arith.addf %95, %94 : vector<16x128xf32>
    %97 = arith.mulf %86, %96 : vector<16x128xf32>
    %c0_31 = arith.constant 0 : index
    %c0_32 = arith.constant 0 : index
    %98 = vector.load %arg7[%c0_31, %c0_32] : memref<3x128xf32, #tpu.memory_space<vmem>>, vector<3x128xf32>
    %c0_33 = arith.constant 0 : index
    %c0_34 = arith.constant 0 : index
    %99 = vector.load %arg6[%c0_33, %c0_34] : memref<128x128xbf16, #tpu.memory_space<vmem>>, vector<128x128xbf16>
    %100 = arith.truncf %97 : vector<16x128xf32> to vector<16x128xbf16>
    %cst_35 = arith.constant dense<0.000000e+00> : vector<16x128xf32>
    %101 = tpu.matmul %100, %99, %cst_35 {dimension_numbers = #tpu.dot_dimension_numbers<[1], [0], [0], [1], [0, 0, 1, 1], [], []>} : vector<16x128xbf16>, vector<128x128xbf16>, vector<16x128xf32> -> vector<16x128xf32>
    %102 = vector.extract_strided_slice %98 {offsets = [0, 0], sizes = [1, 128], strides = [1, 1]} : vector<3x128xf32> to vector<1x128xf32>
    %103 = vector.broadcast %102 : vector<1x128xf32> to vector<16x128xf32>
    %104 = arith.addf %101, %103 : vector<16x128xf32>
    %105 = vector.extract_strided_slice %98 {offsets = [1, 0], sizes = [1, 128], strides = [1, 1]} : vector<3x128xf32> to vector<1x128xf32>
    %106 = vector.extract_strided_slice %98 {offsets = [2, 0], sizes = [1, 128], strides = [1, 1]} : vector<3x128xf32> to vector<1x128xf32>
    %cst_36 = arith.constant dense<0.000000e+00> : vector<16xf32>
    %107 = vector.multi_reduction <add>, %104, %cst_36 [1] : vector<16x128xf32> to vector<16xf32>
    %108 = vector.shape_cast %107 : vector<16xf32> to vector<16x1xf32>
    %cst_37 = arith.constant 3.125000e-02 : f32
    %109 = vector.broadcast %cst_37 : f32 to vector<16x1xf32>
    %110 = arith.mulf %108, %109 : vector<16x1xf32>
    %111 = vector.broadcast %110 : vector<16x1xf32> to vector<16x128xf32>
    %112 = arith.subf %104, %111 : vector<16x128xf32>
    %113 = tpu.iota {dimensions = array<i32: 1>} : vector<1x128xi32>
    %c32_i32 = arith.constant 32 : i32
    %114 = vector.broadcast %c32_i32 : i32 to vector<1x128xi32>
    %115 = arith.cmpi slt, %113, %114 : vector<1x128xi32>
    %116 = arith.extui %115 : vector<1x128xi1> to vector<1x128xi32>
    %117 = arith.sitofp %116 : vector<1x128xi32> to vector<1x128xf32>
    %118 = vector.broadcast %117 : vector<1x128xf32> to vector<16x128xf32>
    %119 = arith.mulf %112, %118 : vector<16x128xf32>
    %120 = arith.mulf %119, %119 : vector<16x128xf32>
    %cst_38 = arith.constant dense<0.000000e+00> : vector<16xf32>
    %121 = vector.multi_reduction <add>, %120, %cst_38 [1] : vector<16x128xf32> to vector<16xf32>
    %122 = vector.shape_cast %121 : vector<16xf32> to vector<16x1xf32>
    %cst_39 = arith.constant 3.125000e-02 : f32
    %123 = vector.broadcast %cst_39 : f32 to vector<16x1xf32>
    %124 = arith.mulf %122, %123 : vector<16x1xf32>
    %cst_40 = arith.constant 9.99999974E-6 : f32
    %125 = vector.broadcast %cst_40 : f32 to vector<16x1xf32>
    %126 = arith.addf %124, %125 : vector<16x1xf32>
    %127 = math.rsqrt %126 : vector<16x1xf32>
    %128 = vector.broadcast %127 : vector<16x1xf32> to vector<16x128xf32>
    %129 = arith.mulf %119, %128 : vector<16x128xf32>
    %130 = vector.broadcast %105 : vector<1x128xf32> to vector<16x128xf32>
    %131 = arith.mulf %129, %130 : vector<16x128xf32>
    %132 = vector.broadcast %106 : vector<1x128xf32> to vector<16x128xf32>
    %133 = arith.addf %131, %132 : vector<16x128xf32>
    %134 = arith.mulf %133, %133 : vector<16x128xf32>
    %cst_41 = arith.constant dense<0.000000e+00> : vector<16xf32>
    %135 = vector.multi_reduction <add>, %134, %cst_41 [1] : vector<16x128xf32> to vector<16xf32>
    %136 = vector.shape_cast %135 : vector<16xf32> to vector<16x1xf32>
    %cst_42 = arith.constant 1.000000e-24 : f32
    %137 = vector.broadcast %cst_42 : f32 to vector<16x1xf32>
    %138 = arith.maximumf %136, %137 : vector<16x1xf32>
    %139 = math.rsqrt %138 : vector<16x1xf32>
    %140 = vector.broadcast %139 : vector<16x1xf32> to vector<16x128xf32>
    %141 = arith.mulf %133, %140 : vector<16x128xf32>
    %c0_43 = arith.constant 0 : index
    %c0_44 = arith.constant 0 : index
    %142 = vector.load %arg8[%c0_43, %c0_44] : memref<16x128xf32, #tpu.memory_space<vmem>>, vector<16x128xf32>
    tpu.vector_store %arg8[%c0_43, %c0_44], %141 {strides = array<i32>} : memref<16x128xf32, #tpu.memory_space<vmem>>, vector<16x128xf32>,
    return
  }
  func.func @transform_0(%arg0: i32) -> (i32, i32) {
    %c0_i32 = arith.constant 0 : i32
    %c0_i32_0 = arith.constant 0 : i32
    return %arg0, %c0_i32 : i32, i32
  }
  func.func @transform_1(%arg0: i32) -> (i32, i32, i32) {
    %c0_i32 = arith.constant 0 : i32
    %c0_i32_0 = arith.constant 0 : i32
    %c0_i32_1 = arith.constant 0 : i32
    %c0_i32_2 = arith.constant 0 : i32
    return %c0_i32, %c0_i32_0, %c0_i32_1 : i32, i32, i32
  }
  func.func @transform_2(%arg0: i32) -> (i32, i32) {
    %c0_i32 = arith.constant 0 : i32
    %c0_i32_0 = arith.constant 0 : i32
    %c0_i32_1 = arith.constant 0 : i32
    return %c0_i32, %c0_i32_0 : i32, i32
  }
  func.func @transform_3(%arg0: i32) -> (i32, i32) {
    %c0_i32 = arith.constant 0 : i32
    %c0_i32_0 = arith.constant 0 : i32
    %c0_i32_1 = arith.constant 0 : i32
    return %c0_i32, %c0_i32_0 : i32, i32
  }
  func.func @transform_4(%arg0: i32) -> (i32, i32) {
    %c0_i32 = arith.constant 0 : i32
    %c0_i32_0 = arith.constant 0 : i32
    %c0_i32_1 = arith.constant 0 : i32
    return %c0_i32, %c0_i32_0 : i32, i32
  }
  func.func @transform_5(%arg0: i32) -> (i32, i32) {
    %c0_i32 = arith.constant 0 : i32
    %c0_i32_0 = arith.constant 0 : i32
    %c0_i32_1 = arith.constant 0 : i32
    return %c0_i32, %c0_i32_0 : i32, i32
  }
  func.func @transform_6(%arg0: i32) -> (i32, i32) {
    %c0_i32 = arith.constant 0 : i32
    %c0_i32_0 = arith.constant 0 : i32
    %c0_i32_1 = arith.constant 0 : i32
    return %c0_i32, %c0_i32_0 : i32, i32
  }
  func.func @transform_7(%arg0: i32) -> (i32, i32) {
    %c0_i32 = arith.constant 0 : i32
    %c0_i32_0 = arith.constant 0 : i32
    return %arg0, %c0_i32 : i32, i32
  }
}

</mosaic_0001>

<llo_original>
// kernel: rna_protein_clip_forward.5
$region0: #{rna_protein_clip_forward.5}
  #allocation0 [shape = 'u32[]', space=smem, size = 0x4, offset = 0x4, fixed_abs, tag = 'smem constant byte address 0x4 - core index']
  #allocation1 [shape = 'u32[72,128]{1,0:T(1,128)}', space=vmem, size = 0x9000, scoped, tag = 'internal scratch']
  #allocation2 [shape = 's32[1]{0}', space=sflag, size = 0x4, scoped, tag = 'scoped memory for rna_protein_clip_forward.5']
  #allocation3 [shape = 'f32[1]{0:T(128)S(6)}', space=smem, size = 0x200, scoped, tag = 'prefetched SMEM operand 0']
  %s0 = inlined_call_operand.<no memory space> [shape: f32[1], index: 0, kind: input, shape index: {}]
  %s1 = inlined_call_operand.vmem [shape: f32[16,128], index: 1, kind: input, shape index: {}]
  %s2 = inlined_call_operand.vmem [shape: f32[128,128], index: 2, kind: input, shape index: {}]
  %s3 = inlined_call_operand.hbm [shape: f32[16,128], index: 3, kind: output, shape index: {}]
  %s4 = sld [smem:[#allocation0]]
  $region18: #{rna_protein_clip_forward.5} parent=0
    _
  %s6 = ssub.s32 1, %s4
  %s7 = scalar_select 0, %s6, %s4
  %8 = sst [smem:[#allocation3]] %s0
  $region1: #{rna_protein_clip_forward.5} parent=0
    #allocation4 [shape = 'u8[8192]{0}', space=vmem, size = 0x2000, scoped, tag = 'output window, operand 0, single buffered']
    #allocation5 [shape = 's32[1]{0}', space=sflag, size = 0x4, scoped, tag = 'scoped memory for rna_protein_clip_forward.5']
    %9 = vsyncpa [#allocation5], 0
    // Predicated region
    $region2: #{rna_protein_clip_forward.5} parent=1 // pred_check
      _
    $region3: #{rna_protein_clip_forward.5} parent=1 // pred_check_branch
      %11 = sbr.rel (0) target = $region5
    $region4: #{rna_protein_clip_forward.5} parent=1 // pred_region
      _
    $region5: #{rna_protein_clip_forward.5} parent=1 // pred_fallthru
      _
    // Predicated region
    $region6: #{rna_protein_clip_forward.5} parent=1 // pred_check
      _
    $region7: #{rna_protein_clip_forward.5} parent=1 // pred_check_branch
      %13 = sbr.rel (0) target = $region9
    $region8: #{rna_protein_clip_forward.5} parent=1 // pred_region
      _
    $region9: #{rna_protein_clip_forward.5} parent=1 // pred_fallthru
      _
    %v14 = vld [vmem:[%s1] sm:$0xff]
    %v15 = vld [vmem:[%s1 + $0x8] sm:$0xff]
    %v16 = vld [vmem:[%s2] sm:$0xff]
    %v17 = vld [vmem:[%s2 + $0x8] sm:$0xff]
    %v18 = vld [vmem:[%s2 + $0x10] sm:$0xff]
    %v19 = vld [vmem:[%s2 + $0x18] sm:$0xff]
    %v20 = vld [vmem:[%s2 + $0x20] sm:$0xff]
    %v21 = vld [vmem:[%s2 + $0x28] sm:$0xff]
    %v22 = vld [vmem:[%s2 + $0x30] sm:$0xff]
    %v23 = vld [vmem:[%s2 + $0x38] sm:$0xff]
    %v24 = vld [vmem:[%s2 + $0x40] sm:$0xff]
    %v25 = vld [vmem:[%s2 + $0x48] sm:$0xff]
    %v26 = vld [vmem:[%s2 + $0x50] sm:$0xff]
    %v27 = vld [vmem:[%s2 + $0x58] sm:$0xff]
    %v28 = vld [vmem:[%s2 + $0x60] sm:$0xff]
    %v29 = vld [vmem:[%s2 + $0x68] sm:$0xff]
    %v30 = vld [vmem:[%s2 + $0x70] sm:$0xff]
    %v31 = vld [vmem:[%s2 + $0x78] sm:$0xff]
    %32 = vmatpush.xpose.msra.mxu0 %v31
    %33 = vmatpush.xpose.msra.mxu0 %v30
    %34 = vmatpush.xpose.msra.mxu0 %v29
    %35 = vmatpush.xpose.msra.mxu0 %v28
    %36 = vmatpush.xpose.msra.mxu0 %v27
    %37 = vmatpush.xpose.msra.mxu0 %v26
    %38 = vmatpush.xpose.msra.mxu0 %v25
    %39 = vmatpush.xpose.msra.mxu0 %v24
    %40 = vmatpush.xpose.msra.mxu0 %v23
    %41 = vmatpush.xpose.msra.mxu0 %v22
    %42 = vmatpush.xpose.msra.mxu0 %v21
    %43 = vmatpush.xpose.msra.mxu0 %v20
    %44 = vmatpush.xpose.msra.mxu0 %v19
    %45 = vmatpush.xpose.msra.mxu0 %v18
    %46 = vmatpush.xpose.msra.mxu0 %v17
    %47 = vmatpush.xpose.msra.mxu0 %v16
    %48 = vmatmul.f32.gmra.mxu0 %v14
    %v49 = vpop.f32.mrf.mxu0
    %v50 = vadd.f32 0.0, %v49
    %51 = vmatmul.f32.gmra.mxu0 %v15
    %v52 = vpop.f32.mrf.mxu0
    %v53 = vadd.f32 0.0, %v52
    %54 = vdwg.mxu0
    %s55 = sld [smem:[#allocation3]]
    %v56 = vstv %s55
    %v57 = vmul.f32 %v50, %v56
    %v58 = vmul.f32 %v53, %v56
    %59 = vst [vmem:[#allocation4] sm:$0xff] %v57
    %60 = vst [vmem:[#allocation4 + $0x8] sm:$0xff] %v58
    // Predicated region
    $region10: #{rna_protein_clip_forward.5} parent=1 // pred_check
      _
    $region11: #{rna_protein_clip_forward.5} parent=1 // pred_check_branch
      %62 = sbr.rel (0) target = $region13
    $region12: #{rna_protein_clip_forward.5} parent=1 // pred_region
      %64 = vsyncadd [#allocation5], 0
      %s65 = sshll.u32 [#allocation4], 4
      %s66 = int_to_ptr.vmem [resolvable:$true] %s65
      %s67 = sshll.u32 %s3, 4
      %s68 = int_to_ptr.hbm [resolvable:$true] %s67
      %73 = dma.vmem_to_hbm [thread:$0]  %s66, 256, %s68, [#allocation5], 128, 128, 8
    $region13: #{rna_protein_clip_forward.5} parent=1 // pred_fallthru
      _
    // Predicated region
    $region14: #{rna_protein_clip_forward.5} parent=1 // pred_check
      _
    $region15: #{rna_protein_clip_forward.5} parent=1 // pred_check_branch
      %75 = sbr.rel (0) target = $region17
    $region16: #{rna_protein_clip_forward.5} parent=1 // pred_region
      %77 = dma.done [#allocation5], 256
    $region17: #{rna_protein_clip_forward.5} parent=1 // pred_fallthru
      _
    %78 = vsyncpa [#allocation5], 1

// kernel: rna_protein_clip_forward.3
$region0: #{rna_protein_clip_forward.3}
  #allocation0 [shape = 'u32[]', space=smem, size = 0x4, offset = 0x4, fixed_abs, tag = 'smem constant byte address 0x4 - core index']
  #allocation1 [shape = 'u32[72,128]{1,0:T(1,128)}', space=vmem, size = 0x9000, scoped, tag = 'internal scratch']
  %s0 = inlined_call_operand.vmem [shape: f32[16,128], index: 0, kind: input, shape index: {}]
  %s1 = inlined_call_operand.hbm [shape: bf16[3,128,128], index: 1, kind: input, shape index: {}]
  %s2 = inlined_call_operand.vmem [shape: f32[5,128], index: 2, kind: input, shape index: {}]
  %s3 = inlined_call_operand.hbm [shape: bf16[128,128], index: 3, kind: input, shape index: {}]
  %s4 = inlined_call_operand.vmem [shape: f32[3,128], index: 4, kind: input, shape index: {}]
  %s5 = inlined_call_operand.hbm [shape: bf16[128,128], index: 5, kind: input, shape index: {}]
  %s6 = inlined_call_operand.vmem [shape: f32[3,128], index: 6, kind: input, shape index: {}]
  %s7 = inlined_call_operand.vmem [shape: f32[16,128], index: 7, kind: output, shape index: {}]
  %s8 = sld [smem:[#allocation0]]
  $region50: #{rna_protein_clip_forward.3} parent=0
    _
  %s10 = ssub.s32 1, %s8
  %s11 = scalar_select 0, %s10, %s8
  $region1: #{rna_protein_clip_forward.3} parent=0
    #allocation2 [shape = 'u8[98304]{0}', space=vmem, size = 0x18000, scoped, tag = 'input window, operand 1, single buffered']
    #allocation3 [shape = 's32[1]{0}', space=sflag, size = 0x4, scoped, tag = 'scoped memory for rna_protein_clip_forward.3']
    #allocation4 [shape = 'u8[32768]{0}', space=vmem, size = 0x8000, scoped, tag = 'input window, operand 3, single buffered']
    #allocation5 [shape = 's32[1]{0}', space=sflag, size = 0x4, scoped, tag = 'scoped memory for rna_protein_clip_forward.3']
    #allocation6 [shape = 'u8[32768]{0}', space=vmem, size = 0x8000, scoped, tag = 'input window, operand 5, single buffered']
    %12 = vsyncpa [#allocation3], 0
    %13 = vsyncpa [#allocation5], 0
    // Predicated region
    $region2: #{rna_protein_clip_forward.3} parent=1 // pred_check
      _
    $region3: #{rna_protein_clip_forward.3} parent=1 // pred_check_branch
      %15 = sbr.rel (0) target = $region5
    $region4: #{rna_protein_clip_forward.3} parent=1 // pred_region
      _
    $region5: #{rna_protein_clip_forward.3} parent=1 // pred_fallthru
      _
    // Predicated region
    $region6: #{rna_protein_clip_forward.3} parent=1 // pred_check
      _
    $region7: #{rna_protein_clip_forward.3} parent=1 // pred_check_branch
      %17 = sbr.rel (0) target = $region9
    $region8: #{rna_protein_clip_forward.3} parent=1 // pred_region
      %19 = vsyncadd [#allocation3], 0
      %s20 = sshll.u32 %s1, 4
      %s21 = int_to_ptr.hbm [resolvable:$true] %s20
      %s22 = sshll.u32 [#allocation2], 4
      %s23 = int_to_ptr.vmem [resolvable:$true] %s22
      %28 = dma.hbm_to_vmem [thread:$0]  %s21, 3072, %s23, [#allocation3], 64, 64, 4
    $region9: #{rna_protein_clip_forward.3} parent=1 // pred_fallthru
      _
    // Predicated region
    $region10: #{rna_protein_clip_forward.3} parent=1 // pred_check
      _
    $region11: #{rna_protein_clip_forward.3} parent=1 // pred_check_branch
      %30 = sbr.rel (0) target = $region13
    $region12: #{rna_protein_clip_forward.3} parent=1 // pred_region
      _
    $region13: #{rna_protein_clip_forward.3} parent=1 // pred_fallthru
      _
    // Predicated region
    $region14: #{rna_protein_clip_forward.3} parent=1 // pred_check
      _
    $region15: #{rna_protein_clip_forward.3} parent=1 // pred_check_branch
      %32 = sbr.rel (0) target = $region17
    $region16: #{rna_protein_clip_forward.3} parent=1 // pred_region
      %34 = vsyncadd [#allocation5], 0
      %s35 = sshll.u32 %s3, 4
      %s36 = int_to_ptr.hbm [resolvable:$true] %s35
      %s37 = sshll.u32 [#allocation4], 4
      %s38 = int_to_ptr.vmem [resolvable:$true] %s37
      %43 = dma.hbm_to_vmem [thread:$0]  %s36, 1024, %s38, [#allocation5], 64, 64, 4
    $region17: #{rna_protein_clip_forward.3} parent=1 // pred_fallthru
      _
    // Predicated region
    $region18: #{rna_protein_clip_forward.3} parent=1 // pred_check
      _
    $region19: #{rna_protein_clip_forward.3} parent=1 // pred_check_branch
      %45 = sbr.rel (0) target = $region21
    $region20: #{rna_protein_clip_forward.3} parent=1 // pred_region
      _
    $region21: #{rna_protein_clip_forward.3} parent=1 // pred_fallthru
      _
    // Predicated region
    $region22: #{rna_protein_clip_forward.3} parent=1 // pred_check
      _
    $region23: #{rna_protein_clip_forward.3} parent=1 // pred_check_branch
      %47 = sbr.rel (0) target = $region25
    $region24: #{rna_protein_clip_forward.3} parent=1 // pred_region
      %49 = vsyncadd [#allocation5], 0
      %s50 = sshll.u32 %s5, 4
      %s51 = int_to_ptr.hbm [resolvable:$true] %s50
      %s52 = sshll.u32 [#allocation6], 4
      %s53 = int_to_ptr.vmem [resolvable:$true] %s52
      %58 = dma.hbm_to_vmem [thread:$0]  %s51, 1024, %s53, [#allocation5], 64, 64, 4
    $region25: #{rna_protein_clip_forward.3} parent=1 // pred_fallthru
      _
    // Predicated region
    $region26: #{rna_protein_clip_forward.3} parent=1 // pred_check
      _
    $region27: #{rna_protein_clip_forward.3} parent=1 // pred_check_branch
      %60 = sbr.rel (0) target = $region29
    $region28: #{rna_protein_clip_forward.3} parent=1 // pred_region
      _
    $region29: #{rna_protein_clip_forward.3} parent=1 // pred_fallthru
      _
    // Predicated region
    $region30: #{rna_protein_clip_forward.3} parent=1 // pred_check
      _
    $region31: #{rna_protein_clip_forward.3} parent=1 // pred_check_branch
      %62 = sbr.rel (0) target = $region33
    $region32: #{rna_protein_clip_forward.3} parent=1 // pred_region
      %64 = dma.done [#allocation3], 3072
    $region33: #{rna_protein_clip_forward.3} parent=1 // pred_fallthru
      _
    // Predicated region
    $region34: #{rna_protein_clip_forward.3} parent=1 // pred_check
      _
    $region35: #{rna_protein_clip_forward.3} parent=1 // pred_check_branch
      %66 = sbr.rel (0) target = $region37
    $region36: #{rna_protein_clip_forward.3} parent=1 // pred_region
      %68 = dma.done [#allocation5], 1024
    $region37: #{rna_protein_clip_forward.3} parent=1 // pred_fallthru
      _
    // Predicated region
    $region38: #{rna_protein_clip_forward.3} parent=1 // pred_check
      _
    $region39: #{rna_protein_clip_forward.3} parent=1 // pred_check_branch
      %70 = sbr.rel (0) target = $region41
    $region40: #{rna_protein_clip_forward.3} parent=1 // pred_region
      %72 = dma.done [#allocation5], 1024
    $region41: #{rna_protein_clip_forward.3} parent=1 // pred_fallthru
      _
    %v73 = vld [vmem:[%s2] sm:$0x1f]
    %v74 = vld [vmem:[%s0] sm:$0xff]
    %v75 = vld [vmem:[%s0 + $0x8] sm:$0xff]
    %v76 = vld [vmem:[#allocation2] sm:$0xf]
    %v77 = vld [vmem:[#allocation2 + $0x4] sm:$0xf]
    %v78 = vld [vmem:[#allocation2 + $0x8] sm:$0xf]
    %v79 = vld [vmem:[#allocation2 + $0xc] sm:$0xf]
    %v80 = vld [vmem:[#allocation2 + $0x10] sm:$0xf]
    %v81 = vld [vmem:[#allocation2 + $0x14] sm:$0xf]
    %v82 = vld [vmem:[#allocation2 + $0x18] sm:$0xf]
    %v83 = vld [vmem:[#allocation2 + $0x1c] sm:$0xf]
    %v84 = vld [vmem:[#allocation2 + $0x20] sm:$0xf]
    %v85 = vld [vmem:[#allocation2 + $0x24] sm:$0xf]
    %v86 = vld [vmem:[#allocation2 + $0x28] sm:$0xf]
    %v87 = vld [vmem:[#allocation2 + $0x2c] sm:$0xf]
    %v88 = vld [vmem:[#allocation2 + $0x30] sm:$0xf]
    %v89 = vld [vmem:[#allocation2 + $0x34] sm:$0xf]
    %v90 = vld [vmem:[#allocation2 + $0x38] sm:$0xf]
    %v91 = vld [vmem:[#allocation2 + $0x3c] sm:$0xf]
    %v92 = vpack.c.bf16 %v75, %v74
    %v93 = vperm.slane %v73, 0
    %v110 = vunpack.c.l.b16 %v76
    %v111 = vunpack.c.l.b16 %v77
    %v112 = vunpack.c.l.b16 %v78
    %v113 = vunpack.c.l.b16 %v79
    %v114 = vunpack.c.l.b16 %v80
    %v115 = vunpack.c.l.b16 %v81
    %v116 = vunpack.c.l.b16 %v82
    %v117 = vunpack.c.l.b16 %v83
    %v118 = vunpack.c.l.b16 %v84
    %v119 = vunpack.c.l.b16 %v85
    %v120 = vunpack.c.l.b16 %v86
    %v121 = vunpack.c.l.b16 %v87
    %v122 = vunpack.c.l.b16 %v88
    %v123 = vunpack.c.l.b16 %v89
    %v124 = vunpack.c.l.b16 %v90
    %v125 = vunpack.c.l.b16 %v91
    %v126 = vpack.c.b16 %v111, %v110
    %v127 = vpack.c.b16 %v113, %v112
    %v128 = vpack.c.b16 %v115, %v114
    %v129 = vpack.c.b16 %v117, %v116
    %v130 = vpack.c.b16 %v119, %v118
    %v131 = vpack.c.b16 %v121, %v120
    %v132 = vpack.c.b16 %v123, %v122
    %v133 = vpack.c.b16 %v125, %v124
    %142 = vmatpush.bf16.msra.mxu0 %v133
    %143 = vmatpush.bf16.msra.mxu0 %v132
    %144 = vmatpush.bf16.msra.mxu0 %v131
    %145 = vmatpush.bf16.msra.mxu0 %v130
    %146 = vmatpush.bf16.msra.mxu0 %v129
    %147 = vmatpush.bf16.msra.mxu0 %v128
    %148 = vmatpush.bf16.msra.mxu0 %v127
    %149 = vmatpush.bf16.msra.mxu0 %v126
    %150 = vmatmul.bf16.gmra.mxu0 %v92
    %v151 = vpop.f32.mrf.mxu0
    %v152 = vadd.f32 %v93, %v151
    %v153 = vpop.f32.mrf.mxu0
    %v154 = vadd.f32 %v93, %v153
    %155 = vdwg.mxu0
    %v156 = vmax.f32 %v152, 0.0
    %v157 = vmax.f32 %v154, 0.0
    %s158 = scalar_lea.vmem [#allocation2], 64
    %v159 = vld [vmem:[%s158] sm:$0xf]
    %v160 = vld [vmem:[%s158 + $0x4] sm:$0xf]
    %v161 = vld [vmem:[%s158 + $0x8] sm:$0xf]
    %v162 = vld [vmem:[%s158 + $0xc] sm:$0xf]
    %v163 = vld [vmem:[%s158 + $0x10] sm:$0xf]
    %v164 = vld [vmem:[%s158 + $0x14] sm:$0xf]
    %v165 = vld [vmem:[%s158 + $0x18] sm:$0xf]
    %v166 = vld [vmem:[%s158 + $0x1c] sm:$0xf]
    %v167 = vld [vmem:[%s158 + $0x20] sm:$0xf]
    %v168 = vld [vmem:[%s158 + $0x24] sm:$0xf]
    %v169 = vld [vmem:[%s158 + $0x28] sm:$0xf]
    %v170 = vld [vmem:[%s158 + $0x2c] sm:$0xf]
    %v171 = vld [vmem:[%s158 + $0x30] sm:$0xf]
    %v172 = vld [vmem:[%s158 + $0x34] sm:$0xf]
    %v173 = vld [vmem:[%s158 + $0x38] sm:$0xf]
    %v174 = vld [vmem:[%s158 + $0x3c] sm:$0xf]
    %v175 = vpack.c.bf16 %v157, %v156
    %v176 = vperm.slane %v73, 1
    %v193 = vunpack.c.l.b16 %v159
    %v194 = vunpack.c.l.b16 %v160
    %v195 = vunpack.c.l.b16 %v161
    %v196 = vunpack.c.l.b16 %v162
    %v197 = vunpack.c.l.b16 %v163
    %v198 = vunpack.c.l.b16 %v164
    %v199 = vunpack.c.l.b16 %v165
    %v200 = vunpack.c.l.b16 %v166
    %v201 = vunpack.c.l.b16 %v167
    %v202 = vunpack.c.l.b16 %v168
    %v203 = vunpack.c.l.b16 %v169
    %v204 = vunpack.c.l.b16 %v170
    %v205 = vunpack.c.l.b16 %v171
    %v206 = vunpack.c.l.b16 %v172
    %v207 = vunpack.c.l.b16 %v173
    %v208 = vunpack.c.l.b16 %v174
    %v209 = vpack.c.b16 %v194, %v193
    %v210 = vpack.c.b16 %v196, %v195
    %v211 = vpack.c.b16 %v198, %v197
    %v212 = vpack.c.b16 %v200, %v199
    %v213 = vpack.c.b16 %v202, %v201
    %v214 = vpack.c.b16 %v204, %v203
    %v215 = vpack.c.b16 %v206, %v205
    %v216 = vpack.c.b16 %v208, %v207
    %225 = vmatpush.bf16.msra.mxu0 %v216
    %226 = vmatpush.bf16.msra.mxu0 %v215
    %227 = vmatpush.bf16.msra.mxu0 %v214
    %228 = vmatpush.bf16.msra.mxu0 %v213
    %229 = vmatpush.bf16.msra.mxu0 %v212
    %230 = vmatpush.bf16.msra.mxu0 %v211
    %231 = vmatpush.bf16.msra.mxu0 %v210
    %232 = vmatpush.bf16.msra.mxu0 %v209
    %233 = vmatmul.bf16.gmra.mxu0 %v175
    %v234 = vpop.f32.mrf.mxu0
    %v235 = vadd.f32 %v176, %v234
    %v236 = vpop.f32.mrf.mxu0
    %v237 = vadd.f32 %v176, %v236
    %238 = vdwg.mxu0
    %v239 = vmax.f32 %v235, 0.0
    %v240 = vmax.f32 %v237, 0.0
    %s241 = scalar_lea.vmem [#allocation2], 128
    %v242 = vld [vmem:[%s241] sm:$0xf]
    %v243 = vld [vmem:[%s241 + $0x4] sm:$0xf]
    %v244 = vld [vmem:[%s241 + $0x8] sm:$0xf]
    %v245 = vld [vmem:[%s241 + $0xc] sm:$0xf]
    %v246 = vld [vmem:[%s241 + $0x10] sm:$0xf]
    %v247 = vld [vmem:[%s241 + $0x14] sm:$0xf]
    %v248 = vld [vmem:[%s241 + $0x18] sm:$0xf]
    %v249 = vld [vmem:[%s241 + $0x1c] sm:$0xf]
    %v250 = vld [vmem:[%s241 + $0x20] sm:$0xf]
    %v251 = vld [vmem:[%s241 + $0x24] sm:$0xf]
    %v252 = vld [vmem:[%s241 + $0x28] sm:$0xf]
    %v253 = vld [vmem:[%s241 + $0x2c] sm:$0xf]
    %v254 = vld [vmem:[%s241 + $0x30] sm:$0xf]
    %v255 = vld [vmem:[%s241 + $0x34] sm:$0xf]
    %v256 = vld [vmem:[%s241 + $0x38] sm:$0xf]
    %v257 = vld [vmem:[%s241 + $0x3c] sm:$0xf]
    %v258 = vpack.c.bf16 %v240, %v239
    %v259 = vperm.slane %v73, 2
    %v276 = vunpack.c.l.b16 %v242
    %v277 = vunpack.c.l.b16 %v243
    %v278 = vunpack.c.l.b16 %v244
    %v279 = vunpack.c.l.b16 %v245
    %v280 = vunpack.c.l.b16 %v246
    %v281 = vunpack.c.l.b16 %v247
    %v282 = vunpack.c.l.b16 %v248
    %v283 = vunpack.c.l.b16 %v249
    %v284 = vunpack.c.l.b16 %v250
    %v285 = vunpack.c.l.b16 %v251
    %v286 = vunpack.c.l.b16 %v252
    %v287 = vunpack.c.l.b16 %v253
    %v288 = vunpack.c.l.b16 %v254
    %v289 = vunpack.c.l.b16 %v255
    %v290 = vunpack.c.l.b16 %v256
    %v291 = vunpack.c.l.b16 %v257
    %v292 = vpack.c.b16 %v277, %v276
    %v293 = vpack.c.b16 %v279, %v278
    %v294 = vpack.c.b16 %v281, %v280
    %v295 = vpack.c.b16 %v283, %v282
    %v296 = vpack.c.b16 %v285, %v284
    %v297 = vpack.c.b16 %v287, %v286
    %v298 = vpack.c.b16 %v289, %v288
    %v299 = vpack.c.b16 %v291, %v290
    %308 = vmatpush.bf16.msra.mxu0 %v299
    %309 = vmatpush.bf16.msra.mxu0 %v298
    %310 = vmatpush.bf16.msra.mxu0 %v297
    %311 = vmatpush.bf16.msra.mxu0 %v296
    %312 = vmatpush.bf16.msra.mxu0 %v295
    %313 = vmatpush.bf16.msra.mxu0 %v294
    %314 = vmatpush.bf16.msra.mxu0 %v293
    %315 = vmatpush.bf16.msra.mxu0 %v292
    %316 = vmatmul.bf16.gmra.mxu0 %v258
    %v317 = vpop.f32.mrf.mxu0
    %v318 = vadd.f32 %v259, %v317
    %v319 = vpop.f32.mrf.mxu0
    %v320 = vadd.f32 %v259, %v319
    %321 = vdwg.mxu0
    %v322 = vmax.f32 %v318, 0.0
    %v323 = vmax.f32 %v320, 0.0
    %324 = vadd.xlane.f32.xlu0 %v322
    %v325 = vpop.xlane.xlu0 %324
    %326 = vadd.xlane.f32.xlu0 %v323
    %v327 = vpop.xlane.xlu0 %326
    %v328 = vmul.f32 %v325, 0.03125
    %v329 = vmul.f32 %v327, 0.03125
    %v330 = vsub.f32 %v322, %v328
    %v331 = vsub.f32 %v323, %v329
    %v332 = vlaneseq
    %v333 = vand.u32 %v332, 127
    %vm334 = vcmp.lt.s32.totalorder %v333, 32
    %v335 = vsel %vm334, 1, 0
    %v336 = vcvt.s32.f32 %v335
    %v337 = vmul.f32 %v330, %v336
    %v338 = vmul.f32 %v331, %v336
    %v339 = vmul.f32 %v337, %v337
    %v340 = vmul.f32 %v338, %v338
    %341 = vadd.xlane.f32.xlu0 %v339
    %v342 = vpop.xlane.xlu0 %341
    %343 = vadd.xlane.f32.xlu0 %v340
    %v344 = vpop.xlane.xlu0 %343
    %v345 = vmul.f32 %v342, 0.03125
    %v346 = vmul.f32 %v344, 0.03125
    %v347 = vadd.f32 %v345, 1e-05
    %v348 = vadd.f32 %v346, 1e-05
    %v349 = vrsqrt.pop %v347
    %v350 = vmul.f32 %v349, %v347
    %v351 = vmul.f32 %v350, %v349
    %v352 = vmul.f32 0.5, %v351
    %v353 = vsub.f32 1.5, %v352
    %v354 = vmul.f32 %v349, %v353
    %vm355 = vweird.f32 %v347
    %vm356 = vweird.f32 %v349
    %vm357 = vmor %vm355, %vm356
    %v358 = vsel %vm357, %v349, %v354
    %v359 = vrsqrt.pop %v348
    %v360 = vmul.f32 %v359, %v348
    %v361 = vmul.f32 %v360, %v359
    %v362 = vmul.f32 0.5, %v361
    %v363 = vsub.f32 1.5, %v362
    %v364 = vmul.f32 %v359, %v363
    %vm365 = vweird.f32 %v348
    %vm366 = vweird.f32 %v359
    %vm367 = vmor %vm365, %vm366
    %v368 = vsel %vm367, %v359, %v364
    %v369 = vmul.f32 %v337, %v358
    %v370 = vmul.f32 %v338, %v368
    %v371 = vperm.slane %v73, 3
    %v372 = vmul.f32 %v369, %v371
    %v373 = vmul.f32 %v370, %v371
    %v374 = vperm.slane %v73, 4
    %v375 = vadd.f32 %v372, %v374
    %v376 = vadd.f32 %v373, %v374
    %v377 = vld [vmem:[%s4] sm:$0x7]
    %v378 = vld [vmem:[#allocation4] sm:$0xf]
    %v379 = vld [vmem:[#allocation4 + $0x4] sm:$0xf]
    %v380 = vld [vmem:[#allocation4 + $0x8] sm:$0xf]
    %v381 = vld [vmem:[#allocation4 + $0xc] sm:$0xf]
    %v382 = vld [vmem:[#allocation4 + $0x10] sm:$0xf]
    %v383 = vld [vmem:[#allocation4 + $0x14] sm:$0xf]
    %v384 = vld [vmem:[#allocation4 + $0x18] sm:$0xf]
    %v385 = vld [vmem:[#allocation4 + $0x1c] sm:$0xf]
    %v386 = vld [vmem:[#allocation4 + $0x20] sm:$0xf]
    %v387 = vld [vmem:[#allocation4 + $0x24] sm:$0xf]
    %v388 = vld [vmem:[#allocation4 + $0x28] sm:$0xf]
    %v389 = vld [vmem:[#allocation4 + $0x2c] sm:$0xf]
    %v390 = vld [vmem:[#allocation4 + $0x30] sm:$0xf]
    %v391 = vld [vmem:[#allocation4 + $0x34] sm:$0xf]
    %v392 = vld [vmem:[#allocation4 + $0x38] sm:$0xf]
    %v393 = vld [vmem:[#allocation4 + $0x3c] sm:$0xf]
    %v394 = vpack.c.bf16 %v376, %v375
    %v395 = vperm.slane %v377, 0
    %v412 = vunpack.c.l.b16 %v378
    %v413 = vunpack.c.l.b16 %v379
    %v414 = vunpack.c.l.b16 %v380
    %v415 = vunpack.c.l.b16 %v381
    %v416 = vunpack.c.l.b16 %v382
    %v417 = vunpack.c.l.b16 %v383
    %v418 = vunpack.c.l.b16 %v384
    %v419 = vunpack.c.l.b16 %v385
    %v420 = vunpack.c.l.b16 %v386
    %v421 = vunpack.c.l.b16 %v387
    %v422 = vunpack.c.l.b16 %v388
    %v423 = vunpack.c.l.b16 %v389
    %v424 = vunpack.c.l.b16 %v390
    %v425 = vunpack.c.l.b16 %v391
    %v426 = vunpack.c.l.b16 %v392
    %v427 = vunpack.c.l.b16 %v393
    %v428 = vpack.c.b16 %v413, %v412
    %v429 = vpack.c.b16 %v415, %v414
    %v430 = vpack.c.b16 %v417, %v416
    %v431 = vpack.c.b16 %v419, %v418
    %v432 = vpack.c.b16 %v421, %v420
    %v433 = vpack.c.b16 %v423, %v422
    %v434 = vpack.c.b16 %v425, %v424
    %v435 = vpack.c.b16 %v427, %v426
    %444 = vmatpush.bf16.msra.mxu0 %v435
    %445 = vmatpush.bf16.msra.mxu0 %v434
    %446 = vmatpush.bf16.msra.mxu0 %v433
    %447 = vmatpush.bf16.msra.mxu0 %v432
    %448 = vmatpush.bf16.msra.mxu0 %v431
    %449 = vmatpush.bf16.msra.mxu0 %v430
    %450 = vmatpush.bf16.msra.mxu0 %v429
    %451 = vmatpush.bf16.msra.mxu0 %v428
    %452 = vmatmul.bf16.gmra.mxu0 %v394
    %v453 = vpop.f32.mrf.mxu0
    %v454 = vadd.f32 %v395, %v453
    %v455 = vpop.f32.mrf.mxu0
    %v456 = vadd.f32 %v395, %v455
    %457 = vdwg.mxu0
    %458 = vadd.xlane.f32.xlu0 %v454
    %v459 = vpop.xlane.xlu0 %458
    %460 = vadd.xlane.f32.xlu0 %v456
    %v461 = vpop.xlane.xlu0 %460
    %v462 = vmul.f32 %v459, 0.015625
    %v463 = vmul.f32 %v461, 0.015625
    %v464 = vsub.f32 %v454, %v462
    %v465 = vsub.f32 %v456, %v463
    %vm466 = vcmp.lt.s32.totalorder %v333, 64
    %v467 = vsel %vm466, 1, 0
    %v468 = vcvt.s32.f32 %v467
    %v469 = vmul.f32 %v464, %v468
    %v470 = vmul.f32 %v465, %v468
    %v471 = vmul.f32 %v469, %v469
    %v472 = vmul.f32 %v470, %v470
    %473 = vadd.xlane.f32.xlu0 %v471
    %v474 = vpop.xlane.xlu0 %473
    %475 = vadd.xlane.f32.xlu0 %v472
    %v476 = vpop.xlane.xlu0 %475
    %v477 = vmul.f32 %v474, 0.015625
    %v478 = vmul.f32 %v476, 0.015625
    %v479 = vadd.f32 %v477, 1e-05
    %v480 = vadd.f32 %v478, 1e-05
    %v481 = vrsqrt.pop %v479
    %v482 = vmul.f32 %v481, %v479
    %v483 = vmul.f32 %v482, %v481
    %v484 = vmul.f32 0.5, %v483
    %v485 = vsub.f32 1.5, %v484
    %v486 = vmul.f32 %v481, %v485
    %vm487 = vweird.f32 %v479
    %vm488 = vweird.f32 %v481
    %vm489 = vmor %vm487, %vm488
    %v490 = vsel %vm489, %v481, %v486
    %v491 = vrsqrt.pop %v480
    %v492 = vmul.f32 %v491, %v480
    %v493 = vmul.f32 %v492, %v491
    %v494 = vmul.f32 0.5, %v493
    %v495 = vsub.f32 1.5, %v494
    %v496 = vmul.f32 %v491, %v495
    %vm497 = vweird.f32 %v480
    %vm498 = vweird.f32 %v491
    %vm499 = vmor %vm497, %vm498
    %v500 = vsel %vm499, %v491, %v496
    %v501 = vmul.f32 %v469, %v490
    %v502 = vmul.f32 %v470, %v500
    %v503 = vperm.slane %v377, 1
    %v504 = vmul.f32 %v501, %v503
    %v505 = vmul.f32 %v502, %v503
    %v506 = vperm.slane %v377, 2
    %v507 = vadd.f32 %v504, %v506
    %v508 = vadd.f32 %v505, %v506
    %v509 = vmul.f32 %v507, 0.5
    %v510 = vmul.f32 %v508, 0.5
    %v511 = vmul.f32 %v507, 0.044715
    %v512 = vmul.f32 %v508, 0.044715
    %v513 = vmul.f32 %v511, %v507
    %v514 = vmul.f32 %v512, %v508
    %v515 = vmul.f32 %v513, %v507
    %v516 = vmul.f32 %v514, %v508
    %v517 = vadd.f32 %v507, %v515
    %v518 = vadd.f32 %v508, %v516
    %v519 = vmul.f32 %v517, 0.7978846
    %v520 = vmul.f32 %v518, 0.7978846
    %v521 = vtanh.pop %v519
    %v522 = vtanh.pop %v520
    %v523 = vadd.f32 %v521, 1.0
    %v524 = vadd.f32 %v522, 1.0
    %v525 = vmul.f32 %v509, %v523
    %v526 = vmul.f32 %v510, %v524
    %v527 = vld [vmem:[%s6] sm:$0x7]
    %v528 = vld [vmem:[#allocation6] sm:$0xf]
    %v529 = vld [vmem:[#allocation6 + $0x4] sm:$0xf]
    %v530 = vld [vmem:[#allocation6 + $0x8] sm:$0xf]
    %v531 = vld [vmem:[#allocation6 + $0xc] sm:$0xf]
    %v532 = vld [vmem:[#allocation6 + $0x10] sm:$0xf]
    %v533 = vld [vmem:[#allocation6 + $0x14] sm:$0xf]
    %v534 = vld [vmem:[#allocation6 + $0x18] sm:$0xf]
    %v535 = vld [vmem:[#allocation6 + $0x1c] sm:$0xf]
    %v536 = vld [vmem:[#allocation6 + $0x20] sm:$0xf]
    %v537 = vld [vmem:[#allocation6 + $0x24] sm:$0xf]
    %v538 = vld [vmem:[#allocation6 + $0x28] sm:$0xf]
    %v539 = vld [vmem:[#allocation6 + $0x2c] sm:$0xf]
    %v540 = vld [vmem:[#allocation6 + $0x30] sm:$0xf]
    %v541 = vld [vmem:[#allocation6 + $0x34] sm:$0xf]
    %v542 = vld [vmem:[#allocation6 + $0x38] sm:$0xf]
    %v543 = vld [vmem:[#allocation6 + $0x3c] sm:$0xf]
    %v544 = vpack.c.bf16 %v526, %v525
    %v545 = vperm.slane %v527, 0
    %v562 = vunpack.c.l.b16 %v528
    %v563 = vunpack.c.l.b16 %v529
    %v564 = vunpack.c.l.b16 %v530
    %v565 = vunpack.c.l.b16 %v531
    %v566 = vunpack.c.l.b16 %v532
    %v567 = vunpack.c.l.b16 %v533
    %v568 = vunpack.c.l.b16 %v534
    %v569 = vunpack.c.l.b16 %v535
    %v570 = vunpack.c.l.b16 %v536
    %v571 = vunpack.c.l.b16 %v537
    %v572 = vunpack.c.l.b16 %v538
    %v573 = vunpack.c.l.b16 %v539
    %v574 = vunpack.c.l.b16 %v540
    %v575 = vunpack.c.l.b16 %v541
    %v576 = vunpack.c.l.b16 %v542
    %v577 = vunpack.c.l.b16 %v543
    %v578 = vpack.c.b16 %v563, %v562
    %v579 = vpack.c.b16 %v565, %v564
    %v580 = vpack.c.b16 %v567, %v566
    %v581 = vpack.c.b16 %v569, %v568
    %v582 = vpack.c.b16 %v571, %v570
    %v583 = vpack.c.b16 %v573, %v572
    %v584 = vpack.c.b16 %v575, %v574
    %v585 = vpack.c.b16 %v577, %v576
    %594 = vmatpush.bf16.msra.mxu0 %v585
    %595 = vmatpush.bf16.msra.mxu0 %v584
    %596 = vmatpush.bf16.msra.mxu0 %v583
    %597 = vmatpush.bf16.msra.mxu0 %v582
    %598 = vmatpush.bf16.msra.mxu0 %v581
    %599 = vmatpush.bf16.msra.mxu0 %v580
    %600 = vmatpush.bf16.msra.mxu0 %v579
    %601 = vmatpush.bf16.msra.mxu0 %v578
    %602 = vmatmul.bf16.gmra.mxu0 %v544
    %v603 = vpop.f32.mrf.mxu0
    %v604 = vadd.f32 %v545, %v603
    %v605 = vpop.f32.mrf.mxu0
    %v606 = vadd.f32 %v545, %v605
    %607 = vdwg.mxu0
    %608 = vadd.xlane.f32.xlu0 %v604
    %v609 = vpop.xlane.xlu0 %608
    %610 = vadd.xlane.f32.xlu0 %v606
    %v611 = vpop.xlane.xlu0 %610
    %v612 = vmul.f32 %v609, 0.03125
    %v613 = vmul.f32 %v611, 0.03125
    %v614 = vsub.f32 %v604, %v612
    %v615 = vsub.f32 %v606, %v613
    %v616 = vmul.f32 %v614, %v336
    %v617 = vmul.f32 %v615, %v336
    %v618 = vmul.f32 %v616, %v616
    %v619 = vmul.f32 %v617, %v617
    %620 = vadd.xlane.f32.xlu0 %v618
    %v621 = vpop.xlane.xlu0 %620
    %622 = vadd.xlane.f32.xlu0 %v619
    %v623 = vpop.xlane.xlu0 %622
    %v624 = vmul.f32 %v621, 0.03125
    %v625 = vmul.f32 %v623, 0.03125
    %v626 = vadd.f32 %v624, 1e-05
    %v627 = vadd.f32 %v625, 1e-05
    %v628 = vrsqrt.pop %v626
    %v629 = vmul.f32 %v628, %v626
    %v630 = vmul.f32 %v629, %v628
    %v631 = vmul.f32 0.5, %v630
    %v632 = vsub.f32 1.5, %v631
    %v633 = vmul.f32 %v628, %v632
    %vm634 = vweird.f32 %v626
    %vm635 = vweird.f32 %v628
    %vm636 = vmor %vm634, %vm635
    %v637 = vsel %vm636, %v628, %v633
    %v638 = vrsqrt.pop %v627
    %v639 = vmul.f32 %v638, %v627
    %v640 = vmul.f32 %v639, %v638
    %v641 = vmul.f32 0.5, %v640
    %v642 = vsub.f32 1.5, %v641
    %v643 = vmul.f32 %v638, %v642
    %vm644 = vweird.f32 %v627
    %vm645 = vweird.f32 %v638
    %vm646 = vmor %vm644, %vm645
    %v647 = vsel %vm646, %v638, %v643
    %v648 = vmul.f32 %v616, %v637
    %v649 = vmul.f32 %v617, %v647
    %v650 = vperm.slane %v527, 1
    %v651 = vmul.f32 %v648, %v650
    %v652 = vmul.f32 %v649, %v650
    %v653 = vperm.slane %v527, 2
    %v654 = vadd.f32 %v651, %v653
    %v655 = vadd.f32 %v652, %v653
    %v656 = vmul.f32 %v654, %v654
    %v657 = vmul.f32 %v655, %v655
    %658 = vadd.xlane.f32.xlu0 %v656
    %v659 = vpop.xlane.xlu0 %658
    %660 = vadd.xlane.f32.xlu0 %v657
    %v661 = vpop.xlane.xlu0 %660
    %v662 = vmax.f32 %v659, 1e-24
    %v663 = vmax.f32 %v661, 1e-24
    %v664 = vrsqrt.pop %v662
    %v665 = vmul.f32 %v664, %v662
    %v666 = vmul.f32 %v665, %v664
    %v667 = vmul.f32 0.5, %v666
    %v668 = vsub.f32 1.5, %v667
    %v669 = vmul.f32 %v664, %v668
    %vm670 = vweird.f32 %v662
    %vm671 = vweird.f32 %v664
    %vm672 = vmor %vm670, %vm671
    %v673 = vsel %vm672, %v664, %v669
    %v674 = vrsqrt.pop %v663
    %v675 = vmul.f32 %v674, %v663
    %v676 = vmul.f32 %v675, %v674
    %v677 = vmul.f32 0.5, %v676
    %v678 = vsub.f32 1.5, %v677
    %v679 = vmul.f32 %v674, %v678
    %vm680 = vweird.f32 %v663
    %vm681 = vweird.f32 %v674
    %vm682 = vmor %vm680, %vm681
    %v683 = vsel %vm682, %v674, %v679
    %v684 = vmul.f32 %v654, %v673
    %v685 = vmul.f32 %v655, %v683
    %686 = vst [vmem:[%s7] sm:$0xff] %v684
    %687 = vst [vmem:[%s7 + $0x8] sm:$0xff] %v685
    // Predicated region
    $region42: #{rna_protein_clip_forward.3} parent=1 // pred_check
      _
    $region43: #{rna_protein_clip_forward.3} parent=1 // pred_check_branch
      %689 = sbr.rel (0) target = $region45
    $region44: #{rna_protein_clip_forward.3} parent=1 // pred_region
      _
    $region45: #{rna_protein_clip_forward.3} parent=1 // pred_fallthru
      _
    // Predicated region
    $region46: #{rna_protein_clip_forward.3} parent=1 // pred_check
      _
    $region47: #{rna_protein_clip_forward.3} parent=1 // pred_check_branch
      %691 = sbr.rel (0) target = $region49
    $region48: #{rna_protein_clip_forward.3} parent=1 // pred_region
      _
    $region49: #{rna_protein_clip_forward.3} parent=1 // pred_fallthru
      _
    %692 = vsyncpa [#allocation3], 1
    %693 = vsyncpa [#allocation5], 1

// kernel: rna_protein_clip_forward.4
$region0: #{rna_protein_clip_forward.4}
  #allocation0 [shape = 'u32[]', space=smem, size = 0x4, offset = 0x4, fixed_abs, tag = 'smem constant byte address 0x4 - core index']
  #allocation1 [shape = 'u32[72,128]{1,0:T(1,128)}', space=vmem, size = 0x9000, scoped, tag = 'internal scratch']
  %s0 = inlined_call_operand.vmem [shape: f32[16,128], index: 0, kind: input, shape index: {}]
  %s1 = inlined_call_operand.vmem [shape: bf16[2,128,128], index: 1, kind: input, shape index: {}]
  %s2 = inlined_call_operand.vmem [shape: f32[4,128], index: 2, kind: input, shape index: {}]
  %s3 = inlined_call_operand.vmem [shape: bf16[128,128], index: 3, kind: input, shape index: {}]
  %s4 = inlined_call_operand.vmem [shape: f32[3,128], index: 4, kind: input, shape index: {}]
  %s5 = inlined_call_operand.vmem [shape: bf16[128,128], index: 5, kind: input, shape index: {}]
  %s6 = inlined_call_operand.vmem [shape: f32[3,128], index: 6, kind: input, shape index: {}]
  %s7 = inlined_call_operand.vmem [shape: f32[16,128], index: 7, kind: output, shape index: {}]
  %s8 = sld [smem:[#allocation0]]
  $region38: #{rna_protein_clip_forward.4} parent=0
    _
  %s10 = ssub.s32 1, %s8
  %s11 = scalar_select 0, %s10, %s8
  // Predicated region
  $region2: #{rna_protein_clip_forward.4} parent=0 // pred_check
    _
  $region3: #{rna_protein_clip_forward.4} parent=0 // pred_check_branch
    %13 = sbr.rel (0) target = $region5
  $region4: #{rna_protein_clip_forward.4} parent=0 // pred_region
    _
  $region5: #{rna_protein_clip_forward.4} parent=0 // pred_fallthru
    _
  // Predicated region
  $region6: #{rna_protein_clip_forward.4} parent=0 // pred_check
    _
  $region7: #{rna_protein_clip_forward.4} parent=0 // pred_check_branch
    %15 = sbr.rel (0) target = $region9
  $region8: #{rna_protein_clip_forward.4} parent=0 // pred_region
    _
  $region9: #{rna_protein_clip_forward.4} parent=0 // pred_fallthru
    _
  // Predicated region
  $region10: #{rna_protein_clip_forward.4} parent=0 // pred_check
    _
  $region11: #{rna_protein_clip_forward.4} parent=0 // pred_check_branch
    %17 = sbr.rel (0) target = $region13
  $region12: #{rna_protein_clip_forward.4} parent=0 // pred_region
    _
  $region13: #{rna_protein_clip_forward.4} parent=0 // pred_fallthru
    _
  // Predicated region
  $region14: #{rna_protein_clip_forward.4} parent=0 // pred_check
    _
  $region15: #{rna_protein_clip_forward.4} parent=0 // pred_check_branch
    %19 = sbr.rel (0) target = $region17
  $region16: #{rna_protein_clip_forward.4} parent=0 // pred_region
    _
  $region17: #{rna_protein_clip_forward.4} parent=0 // pred_fallthru
    _
  // Predicated region
  $region18: #{rna_protein_clip_forward.4} parent=0 // pred_check
    _
  $region19: #{rna_protein_clip_forward.4} parent=0 // pred_check_branch
    %21 = sbr.rel (0) target = $region21
  $region20: #{rna_protein_clip_forward.4} parent=0 // pred_region
    _
  $region21: #{rna_protein_clip_forward.4} parent=0 // pred_fallthru
    _
  // Predicated region
  $region22: #{rna_protein_clip_forward.4} parent=0 // pred_check
    _
  $region23: #{rna_protein_clip_forward.4} parent=0 // pred_check_branch
    %23 = sbr.rel (0) target = $region25
  $region24: #{rna_protein_clip_forward.4} parent=0 // pred_region
    _
  $region25: #{rna_protein_clip_forward.4} parent=0 // pred_fallthru
    _
  // Predicated region
  $region26: #{rna_protein_clip_forward.4} parent=0 // pred_check
    _
  $region27: #{rna_protein_clip_forward.4} parent=0 // pred_check_branch
    %25 = sbr.rel (0) target = $region29
  $region28: #{rna_protein_clip_forward.4} parent=0 // pred_region
    _
  $region29: #{rna_protein_clip_forward.4} parent=0 // pred_fallthru
    _
  %v26 = vld [vmem:[%s2] sm:$0xf]
  %v27 = vld [vmem:[%s0] sm:$0xff]
  %v28 = vld [vmem:[%s0 + $0x8] sm:$0xff]
  %v29 = vld [vmem:[%s1] sm:$0xf]
  %v30 = vld [vmem:[%s1 + $0x4] sm:$0xf]
  %v31 = vld [vmem:[%s1 + $0x8] sm:$0xf]
  %v32 = vld [vmem:[%s1 + $0xc] sm:$0xf]
  %v33 = vld [vmem:[%s1 + $0x10] sm:$0xf]
  %v34 = vld [vmem:[%s1 + $0x14] sm:$0xf]
  %v35 = vld [vmem:[%s1 + $0x18] sm:$0xf]
  %v36 = vld [vmem:[%s1 + $0x1c] sm:$0xf]
  %v37 = vld [vmem:[%s1 + $0x20] sm:$0xf]
  %v38 = vld [vmem:[%s1 + $0x24] sm:$0xf]
  %v39 = vld [vmem:[%s1 + $0x28] sm:$0xf]
  %v40 = vld [vmem:[%s1 + $0x2c] sm:$0xf]
  %v41 = vld [vmem:[%s1 + $0x30] sm:$0xf]
  %v42 = vld [vmem:[%s1 + $0x34] sm:$0xf]
  %v43 = vld [vmem:[%s1 + $0x38] sm:$0xf]
  %v44 = vld [vmem:[%s1 + $0x3c] sm:$0xf]
  %v45 = vpack.c.bf16 %v28, %v27
  %v46 = vperm.slane %v26, 0
  %v63 = vunpack.c.l.b16 %v29
  %v64 = vunpack.c.l.b16 %v30
  %v65 = vunpack.c.l.b16 %v31
  %v66 = vunpack.c.l.b16 %v32
  %v67 = vunpack.c.l.b16 %v33
  %v68 = vunpack.c.l.b16 %v34
  %v69 = vunpack.c.l.b16 %v35
  %v70 = vunpack.c.l.b16 %v36
  %v71 = vunpack.c.l.b16 %v37
  %v72 = vunpack.c.l.b16 %v38
  %v73 = vunpack.c.l.b16 %v39
  %v74 = vunpack.c.l.b16 %v40
  %v75 = vunpack.c.l.b16 %v41
  %v76 = vunpack.c.l.b16 %v42
  %v77 = vunpack.c.l.b16 %v43
  %v78 = vunpack.c.l.b16 %v44
  %v79 = vpack.c.b16 %v64, %v63
  %v80 = vpack.c.b16 %v66, %v65
  %v81 = vpack.c.b16 %v68, %v67
  %v82 = vpack.c.b16 %v70, %v69
  %v83 = vpack.c.b16 %v72, %v71
  %v84 = vpack.c.b16 %v74, %v73
  %v85 = vpack.c.b16 %v76, %v75
  %v86 = vpack.c.b16 %v78, %v77
  %95 = vmatpush.bf16.msra.mxu0 %v86
  %96 = vmatpush.bf16.msra.mxu0 %v85
  %97 = vmatpush.bf16.msra.mxu0 %v84
  %98 = vmatpush.bf16.msra.mxu0 %v83
  %99 = vmatpush.bf16.msra.mxu0 %v82
  %100 = vmatpush.bf16.msra.mxu0 %v81
  %101 = vmatpush.bf16.msra.mxu0 %v80
  %102 = vmatpush.bf16.msra.mxu0 %v79
  %103 = vmatmul.bf16.gmra.mxu0 %v45
  %v104 = vpop.f32.mrf.mxu0
  %v105 = vadd.f32 %v46, %v104
  %v106 = vpop.f32.mrf.mxu0
  %v107 = vadd.f32 %v46, %v106
  %108 = vdwg.mxu0
  %v109 = vmax.f32 %v105, 0.0
  %v110 = vmax.f32 %v107, 0.0
  %s111 = scalar_lea.vmem %s1, 64
  %v112 = vld [vmem:[%s111] sm:$0xf]
  %v113 = vld [vmem:[%s111 + $0x4] sm:$0xf]
  %v114 = vld [vmem:[%s111 + $0x8] sm:$0xf]
  %v115 = vld [vmem:[%s111 + $0xc] sm:$0xf]
  %v116 = vld [vmem:[%s111 + $0x10] sm:$0xf]
  %v117 = vld [vmem:[%s111 + $0x14] sm:$0xf]
  %v118 = vld [vmem:[%s111 + $0x18] sm:$0xf]
  %v119 = vld [vmem:[%s111 + $0x1c] sm:$0xf]
  %v120 = vld [vmem:[%s111 + $0x20] sm:$0xf]
  %v121 = vld [vmem:[%s111 + $0x24] sm:$0xf]
  %v122 = vld [vmem:[%s111 + $0x28] sm:$0xf]
  %v123 = vld [vmem:[%s111 + $0x2c] sm:$0xf]
  %v124 = vld [vmem:[%s111 + $0x30] sm:$0xf]
  %v125 = vld [vmem:[%s111 + $0x34] sm:$0xf]
  %v126 = vld [vmem:[%s111 + $0x38] sm:$0xf]
  %v127 = vld [vmem:[%s111 + $0x3c] sm:$0xf]
  %v128 = vpack.c.bf16 %v110, %v109
  %v129 = vperm.slane %v26, 1
  %v146 = vunpack.c.l.b16 %v112
  %v147 = vunpack.c.l.b16 %v113
  %v148 = vunpack.c.l.b16 %v114
  %v149 = vunpack.c.l.b16 %v115
  %v150 = vunpack.c.l.b16 %v116
  %v151 = vunpack.c.l.b16 %v117
  %v152 = vunpack.c.l.b16 %v118
  %v153 = vunpack.c.l.b16 %v119
  %v154 = vunpack.c.l.b16 %v120
  %v155 = vunpack.c.l.b16 %v121
  %v156 = vunpack.c.l.b16 %v122
  %v157 = vunpack.c.l.b16 %v123
  %v158 = vunpack.c.l.b16 %v124
  %v159 = vunpack.c.l.b16 %v125
  %v160 = vunpack.c.l.b16 %v126
  %v161 = vunpack.c.l.b16 %v127
  %v162 = vpack.c.b16 %v147, %v146
  %v163 = vpack.c.b16 %v149, %v148
  %v164 = vpack.c.b16 %v151, %v150
  %v165 = vpack.c.b16 %v153, %v152
  %v166 = vpack.c.b16 %v155, %v154
  %v167 = vpack.c.b16 %v157, %v156
  %v168 = vpack.c.b16 %v159, %v158
  %v169 = vpack.c.b16 %v161, %v160
  %178 = vmatpush.bf16.msra.mxu0 %v169
  %179 = vmatpush.bf16.msra.mxu0 %v168
  %180 = vmatpush.bf16.msra.mxu0 %v167
  %181 = vmatpush.bf16.msra.mxu0 %v166
  %182 = vmatpush.bf16.msra.mxu0 %v165
  %183 = vmatpush.bf16.msra.mxu0 %v164
  %184 = vmatpush.bf16.msra.mxu0 %v163
  %185 = vmatpush.bf16.msra.mxu0 %v162
  %186 = vmatmul.bf16.gmra.mxu0 %v128
  %v187 = vpop.f32.mrf.mxu0
  %v188 = vadd.f32 %v129, %v187
  %v189 = vpop.f32.mrf.mxu0
  %v190 = vadd.f32 %v129, %v189
  %191 = vdwg.mxu0
  %v192 = vmax.f32 %v188, 0.0
  %v193 = vmax.f32 %v190, 0.0
  %194 = vadd.xlane.f32.xlu0 %v192
  %v195 = vpop.xlane.xlu0 %194
  %196 = vadd.xlane.f32.xlu0 %v193
  %v197 = vpop.xlane.xlu0 %196
  %v198 = vmul.f32 %v195, 0.015625
  %v199 = vmul.f32 %v197, 0.015625
  %v200 = vsub.f32 %v192, %v198
  %v201 = vsub.f32 %v193, %v199
  %v202 = vlaneseq
  %v203 = vand.u32 %v202, 127
  %vm204 = vcmp.lt.s32.totalorder %v203, 64
  %v205 = vsel %vm204, 1, 0
  %v206 = vcvt.s32.f32 %v205
  %v207 = vmul.f32 %v200, %v206
  %v208 = vmul.f32 %v201, %v206
  %v209 = vmul.f32 %v207, %v207
  %v210 = vmul.f32 %v208, %v208
  %211 = vadd.xlane.f32.xlu0 %v209
  %v212 = vpop.xlane.xlu0 %211
  %213 = vadd.xlane.f32.xlu0 %v210
  %v214 = vpop.xlane.xlu0 %213
  %v215 = vmul.f32 %v212, 0.015625
  %v216 = vmul.f32 %v214, 0.015625
  %v217 = vadd.f32 %v215, 1e-05
  %v218 = vadd.f32 %v216, 1e-05
  %v219 = vrsqrt.pop %v217
  %v220 = vmul.f32 %v219, %v217
  %v221 = vmul.f32 %v220, %v219
  %v222 = vmul.f32 0.5, %v221
  %v223 = vsub.f32 1.5, %v222
  %v224 = vmul.f32 %v219, %v223
  %vm225 = vweird.f32 %v217
  %vm226 = vweird.f32 %v219
  %vm227 = vmor %vm225, %vm226
  %v228 = vsel %vm227, %v219, %v224
  %v229 = vrsqrt.pop %v218
  %v230 = vmul.f32 %v229, %v218
  %v231 = vmul.f32 %v230, %v229
  %v232 = vmul.f32 0.5, %v231
  %v233 = vsub.f32 1.5, %v232
  %v234 = vmul.f32 %v229, %v233
  %vm235 = vweird.f32 %v218
  %vm236 = vweird.f32 %v229
  %vm237 = vmor %vm235, %vm236
  %v238 = vsel %vm237, %v229, %v234
  %v239 = vmul.f32 %v207, %v228
  %v240 = vmul.f32 %v208, %v238
  %v241 = vperm.slane %v26, 2
  %v242 = vmul.f32 %v239, %v241
  %v243 = vmul.f32 %v240, %v241
  %v244 = vperm.slane %v26, 3
  %v245 = vadd.f32 %v242, %v244
  %v246 = vadd.f32 %v243, %v244
  %v247 = vld [vmem:[%s4] sm:$0x7]
  %v248 = vld [vmem:[%s3] sm:$0xf]
  %v249 = vld [vmem:[%s3 + $0x4] sm:$0xf]
  %v250 = vld [vmem:[%s3 + $0x8] sm:$0xf]
  %v251 = vld [vmem:[%s3 + $0xc] sm:$0xf]
  %v252 = vld [vmem:[%s3 + $0x10] sm:$0xf]
  %v253 = vld [vmem:[%s3 + $0x14] sm:$0xf]
  %v254 = vld [vmem:[%s3 + $0x18] sm:$0xf]
  %v255 = vld [vmem:[%s3 + $0x1c] sm:$0xf]
  %v256 = vld [vmem:[%s3 + $0x20] sm:$0xf]
  %v257 = vld [vmem:[%s3 + $0x24] sm:$0xf]
  %v258 = vld [vmem:[%s3 + $0x28] sm:$0xf]
  %v259 = vld [vmem:[%s3 + $0x2c] sm:$0xf]
  %v260 = vld [vmem:[%s3 + $0x30] sm:$0xf]
  %v261 = vld [vmem:[%s3 + $0x34] sm:$0xf]
  %v262 = vld [vmem:[%s3 + $0x38] sm:$0xf]
  %v263 = vld [vmem:[%s3 + $0x3c] sm:$0xf]
  %v264 = vpack.c.bf16 %v246, %v245
  %v265 = vperm.slane %v247, 0
  %v282 = vunpack.c.l.b16 %v248
  %v283 = vunpack.c.l.b16 %v249
  %v284 = vunpack.c.l.b16 %v250
  %v285 = vunpack.c.l.b16 %v251
  %v286 = vunpack.c.l.b16 %v252
  %v287 = vunpack.c.l.b16 %v253
  %v288 = vunpack.c.l.b16 %v254
  %v289 = vunpack.c.l.b16 %v255
  %v290 = vunpack.c.l.b16 %v256
  %v291 = vunpack.c.l.b16 %v257
  %v292 = vunpack.c.l.b16 %v258
  %v293 = vunpack.c.l.b16 %v259
  %v294 = vunpack.c.l.b16 %v260
  %v295 = vunpack.c.l.b16 %v261
  %v296 = vunpack.c.l.b16 %v262
  %v297 = vunpack.c.l.b16 %v263
  %v298 = vpack.c.b16 %v283, %v282
  %v299 = vpack.c.b16 %v285, %v284
  %v300 = vpack.c.b16 %v287, %v286
  %v301 = vpack.c.b16 %v289, %v288
  %v302 = vpack.c.b16 %v291, %v290
  %v303 = vpack.c.b16 %v293, %v292
  %v304 = vpack.c.b16 %v295, %v294
  %v305 = vpack.c.b16 %v297, %v296
  %314 = vmatpush.bf16.msra.mxu0 %v305
  %315 = vmatpush.bf16.msra.mxu0 %v304
  %316 = vmatpush.bf16.msra.mxu0 %v303
  %317 = vmatpush.bf16.msra.mxu0 %v302
  %318 = vmatpush.bf16.msra.mxu0 %v301
  %319 = vmatpush.bf16.msra.mxu0 %v300
  %320 = vmatpush.bf16.msra.mxu0 %v299
  %321 = vmatpush.bf16.msra.mxu0 %v298
  %322 = vmatmul.bf16.gmra.mxu0 %v264
  %v323 = vpop.f32.mrf.mxu0
  %v324 = vadd.f32 %v265, %v323
  %v325 = vpop.f32.mrf.mxu0
  %v326 = vadd.f32 %v265, %v325
  %327 = vdwg.mxu0
  %328 = vadd.xlane.f32.xlu0 %v324
  %v329 = vpop.xlane.xlu0 %328
  %330 = vadd.xlane.f32.xlu0 %v326
  %v331 = vpop.xlane.xlu0 %330
  %v332 = vmul.f32 %v329, 0.015625
  %v333 = vmul.f32 %v331, 0.015625
  %v334 = vsub.f32 %v324, %v332
  %v335 = vsub.f32 %v326, %v333
  %v336 = vmul.f32 %v334, %v206
  %v337 = vmul.f32 %v335, %v206
  %v338 = vmul.f32 %v336, %v336
  %v339 = vmul.f32 %v337, %v337
  %340 = vadd.xlane.f32.xlu0 %v338
  %v341 = vpop.xlane.xlu0 %340
  %342 = vadd.xlane.f32.xlu0 %v339
  %v343 = vpop.xlane.xlu0 %342
  %v344 = vmul.f32 %v341, 0.015625
  %v345 = vmul.f32 %v343, 0.015625
  %v346 = vadd.f32 %v344, 1e-05
  %v347 = vadd.f32 %v345, 1e-05
  %v348 = vrsqrt.pop %v346
  %v349 = vmul.f32 %v348, %v346
  %v350 = vmul.f32 %v349, %v348
  %v351 = vmul.f32 0.5, %v350
  %v352 = vsub.f32 1.5, %v351
  %v353 = vmul.f32 %v348, %v352
  %vm354 = vweird.f32 %v346
  %vm355 = vweird.f32 %v348
  %vm356 = vmor %vm354, %vm355
  %v357 = vsel %vm356, %v348, %v353
  %v358 = vrsqrt.pop %v347
  %v359 = vmul.f32 %v358, %v347
  %v360 = vmul.f32 %v359, %v358
  %v361 = vmul.f32 0.5, %v360
  %v362 = vsub.f32 1.5, %v361
  %v363 = vmul.f32 %v358, %v362
  %vm364 = vweird.f32 %v347
  %vm365 = vweird.f32 %v358
  %vm366 = vmor %vm364, %vm365
  %v367 = vsel %vm366, %v358, %v363
  %v368 = vmul.f32 %v336, %v357
  %v369 = vmul.f32 %v337, %v367
  %v370 = vperm.slane %v247, 1
  %v371 = vmul.f32 %v368, %v370
  %v372 = vmul.f32 %v369, %v370
  %v373 = vperm.slane %v247, 2
  %v374 = vadd.f32 %v371, %v373
  %v375 = vadd.f32 %v372, %v373
  %v376 = vmul.f32 %v374, 0.5
  %v377 = vmul.f32 %v375, 0.5
  %v378 = vmul.f32 %v374, 0.044715
  %v379 = vmul.f32 %v375, 0.044715
  %v380 = vmul.f32 %v378, %v374
  %v381 = vmul.f32 %v379, %v375
  %v382 = vmul.f32 %v380, %v374
  %v383 = vmul.f32 %v381, %v375
  %v384 = vadd.f32 %v374, %v382
  %v385 = vadd.f32 %v375, %v383
  %v386 = vmul.f32 %v384, 0.7978846
  %v387 = vmul.f32 %v385, 0.7978846
  %v388 = vtanh.pop %v386
  %v389 = vtanh.pop %v387
  %v390 = vadd.f32 %v388, 1.0
  %v391 = vadd.f32 %v389, 1.0
  %v392 = vmul.f32 %v376, %v390
  %v393 = vmul.f32 %v377, %v391
  %v394 = vld [vmem:[%s6] sm:$0x7]
  %v395 = vld [vmem:[%s5] sm:$0xf]
  %v396 = vld [vmem:[%s5 + $0x4] sm:$0xf]
  %v397 = vld [vmem:[%s5 + $0x8] sm:$0xf]
  %v398 = vld [vmem:[%s5 + $0xc] sm:$0xf]
  %v399 = vld [vmem:[%s5 + $0x10] sm:$0xf]
  %v400 = vld [vmem:[%s5 + $0x14] sm:$0xf]
  %v401 = vld [vmem:[%s5 + $0x18] sm:$0xf]
  %v402 = vld [vmem:[%s5 + $0x1c] sm:$0xf]
  %v403 = vld [vmem:[%s5 + $0x20] sm:$0xf]
  %v404 = vld [vmem:[%s5 + $0x24] sm:$0xf]
  %v405 = vld [vmem:[%s5 + $0x28] sm:$0xf]
  %v406 = vld [vmem:[%s5 + $0x2c] sm:$0xf]
  %v407 = vld [vmem:[%s5 + $0x30] sm:$0xf]
  %v408 = vld [vmem:[%s5 + $0x34] sm:$0xf]
  %v409 = vld [vmem:[%s5 + $0x38] sm:$0xf]
  %v410 = vld [vmem:[%s5 + $0x3c] sm:$0xf]
  %v411 = vpack.c.bf16 %v393, %v392
  %v412 = vperm.slane %v394, 0
  %v429 = vunpack.c.l.b16 %v395
  %v430 = vunpack.c.l.b16 %v396
  %v431 = vunpack.c.l.b16 %v397
  %v432 = vunpack.c.l.b16 %v398
  %v433 = vunpack.c.l.b16 %v399
  %v434 = vunpack.c.l.b16 %v400
  %v435 = vunpack.c.l.b16 %v401
  %v436 = vunpack.c.l.b16 %v402
  %v437 = vunpack.c.l.b16 %v403
  %v438 = vunpack.c.l.b16 %v404
  %v439 = vunpack.c.l.b16 %v405
  %v440 = vunpack.c.l.b16 %v406
  %v441 = vunpack.c.l.b16 %v407
  %v442 = vunpack.c.l.b16 %v408
  %v443 = vunpack.c.l.b16 %v409
  %v444 = vunpack.c.l.b16 %v410
  %v445 = vpack.c.b16 %v430, %v429
  %v446 = vpack.c.b16 %v432, %v431
  %v447 = vpack.c.b16 %v434, %v433
  %v448 = vpack.c.b16 %v436, %v435
  %v449 = vpack.c.b16 %v438, %v437
  %v450 = vpack.c.b16 %v440, %v439
  %v451 = vpack.c.b16 %v442, %v441
  %v452 = vpack.c.b16 %v444, %v443
  %461 = vmatpush.bf16.msra.mxu0 %v452
  %462 = vmatpush.bf16.msra.mxu0 %v451
  %463 = vmatpush.bf16.msra.mxu0 %v450
  %464 = vmatpush.bf16.msra.mxu0 %v449
  %465 = vmatpush.bf16.msra.mxu0 %v448
  %466 = vmatpush.bf16.msra.mxu0 %v447
  %467 = vmatpush.bf16.msra.mxu0 %v446
  %468 = vmatpush.bf16.msra.mxu0 %v445
  %469 = vmatmul.bf16.gmra.mxu0 %v411
  %v470 = vpop.f32.mrf.mxu0
  %v471 = vadd.f32 %v412, %v470
  %v472 = vpop.f32.mrf.mxu0
  %v473 = vadd.f32 %v412, %v472
  %474 = vdwg.mxu0
  %475 = vadd.xlane.f32.xlu0 %v471
  %v476 = vpop.xlane.xlu0 %475
  %477 = vadd.xlane.f32.xlu0 %v473
  %v478 = vpop.xlane.xlu0 %477
  %v479 = vmul.f32 %v476, 0.03125
  %v480 = vmul.f32 %v478, 0.03125
  %v481 = vsub.f32 %v471, %v479
  %v482 = vsub.f32 %v473, %v480
  %vm483 = vcmp.lt.s32.totalorder %v203, 32
  %v484 = vsel %vm483, 1, 0
  %v485 = vcvt.s32.f32 %v484
  %v486 = vmul.f32 %v481, %v485
  %v487 = vmul.f32 %v482, %v485
  %v488 = vmul.f32 %v486, %v486
  %v489 = vmul.f32 %v487, %v487
  %490 = vadd.xlane.f32.xlu0 %v488
  %v491 = vpop.xlane.xlu0 %490
  %492 = vadd.xlane.f32.xlu0 %v489
  %v493 = vpop.xlane.xlu0 %492
  %v494 = vmul.f32 %v491, 0.03125
  %v495 = vmul.f32 %v493, 0.03125
  %v496 = vadd.f32 %v494, 1e-05
  %v497 = vadd.f32 %v495, 1e-05
  %v498 = vrsqrt.pop %v496
  %v499 = vmul.f32 %v498, %v496
  %v500 = vmul.f32 %v499, %v498
  %v501 = vmul.f32 0.5, %v500
  %v502 = vsub.f32 1.5, %v501
  %v503 = vmul.f32 %v498, %v502
  %vm504 = vweird.f32 %v496
  %vm505 = vweird.f32 %v498
  %vm506 = vmor %vm504, %vm505
  %v507 = vsel %vm506, %v498, %v503
  %v508 = vrsqrt.pop %v497
  %v509 = vmul.f32 %v508, %v497
  %v510 = vmul.f32 %v509, %v508
  %v511 = vmul.f32 0.5, %v510
  %v512 = vsub.f32 1.5, %v511
  %v513 = vmul.f32 %v508, %v512
  %vm514 = vweird.f32 %v497
  %vm515 = vweird.f32 %v508
  %vm516 = vmor %vm514, %vm515
  %v517 = vsel %vm516, %v508, %v513
  %v518 = vmul.f32 %v486, %v507
  %v519 = vmul.f32 %v487, %v517
  %v520 = vperm.slane %v394, 1
  %v521 = vmul.f32 %v518, %v520
  %v522 = vmul.f32 %v519, %v520
  %v523 = vperm.slane %v394, 2
  %v524 = vadd.f32 %v521, %v523
  %v525 = vadd.f32 %v522, %v523
  %v526 = vmul.f32 %v524, %v524
  %v527 = vmul.f32 %v525, %v525
  %528 = vadd.xlane.f32.xlu0 %v526
  %v529 = vpop.xlane.xlu0 %528
  %530 = vadd.xlane.f32.xlu0 %v527
  %v531 = vpop.xlane.xlu0 %530
  %v532 = vmax.f32 %v529, 1e-24
  %v533 = vmax.f32 %v531, 1e-24
  %v534 = vrsqrt.pop %v532
  %v535 = vmul.f32 %v534, %v532
  %v536 = vmul.f32 %v535, %v534
  %v537 = vmul.f32 0.5, %v536
  %v538 = vsub.f32 1.5, %v537
  %v539 = vmul.f32 %v534, %v538
  %vm540 = vweird.f32 %v532
  %vm541 = vweird.f32 %v534
  %vm542 = vmor %vm540, %vm541
  %v543 = vsel %vm542, %v534, %v539
  %v544 = vrsqrt.pop %v533
  %v545 = vmul.f32 %v544, %v533
  %v546 = vmul.f32 %v545, %v544
  %v547 = vmul.f32 0.5, %v546
  %v548 = vsub.f32 1.5, %v547
  %v549 = vmul.f32 %v544, %v548
  %vm550 = vweird.f32 %v533
  %vm551 = vweird.f32 %v544
  %vm552 = vmor %vm550, %vm551
  %v553 = vsel %vm552, %v544, %v549
  %v554 = vmul.f32 %v524, %v543
  %v555 = vmul.f32 %v525, %v553
  %556 = vst [vmem:[%s7] sm:$0xff] %v554
  %557 = vst [vmem:[%s7 + $0x8] sm:$0xff] %v555
  // Predicated region
  $region30: #{rna_protein_clip_forward.4} parent=0 // pred_check
    _
  $region31: #{rna_protein_clip_forward.4} parent=0 // pred_check_branch
    %559 = sbr.rel (0) target = $region33
  $region32: #{rna_protein_clip_forward.4} parent=0 // pred_region
    _
  $region33: #{rna_protein_clip_forward.4} parent=0 // pred_fallthru
    _
  // Predicated region
  $region34: #{rna_protein_clip_forward.4} parent=0 // pred_check
    _
  $region35: #{rna_protein_clip_forward.4} parent=0 // pred_check_branch
    %561 = sbr.rel (0) target = $region37
  $region36: #{rna_protein_clip_forward.4} parent=0 // pred_region
    _
  $region37: #{rna_protein_clip_forward.4} parent=0 // pred_fallthru
    _

</llo_original>
